<compile_context>
chip_gen: v6e
topology: v6e:2x2x1
jax: 0.10.0
libtpu: 0.0.40
codegen_flags: <defaults>
</compile_context>

<pallas_src>
import functools
import math

import jax
import jax.numpy as jnp
import numpy as np
from jax.experimental import pallas as pl
from jax.experimental.pallas import tpu as pltpu

# ----------------------- configuration (mirrors module __init__) -----------------------
HIDDEN = 32            # config.hidden_size
NUM_HEADS = 4          # config.attn_num_heads
HEAD_DIM = HIDDEN // NUM_HEADS
EDGE_TYPE_COUNT = 2    # config.edge_type_count (backward_edges=False)

NUM_NODES = 16         # nodes per graph
EDGES_PER_TYPE = 12    # edges per type per graph
NUM_GRAPHS = 8         # graphs in the batch
GRAPHS_PER_BLOCK = 4   # graphs fused per grid step (one "block")


# --------------------------- constant-slab row layout (shared) ---------------------------
def _align8(x):
    return (x + 7) // 8 * 8


def slab_layout(D, num_types, num_heads, MB):
    """Row offsets of the packed constant slab (width = 2*T*D + D). All section starts
    are multiples of 8 (sublane-tile aligned)."""
    KV = 2 * num_types * D
    lay, r = {}, 0
    lay["W_ALL"] = r; r += D                    # (D, KV+D)  [k0|v0|k1|v1|...|q], pre-T
    lay["B_ALL"] = r; r = _align8(r + 1)        # (1, KV+D)
    lay["WO"] = r;    r += D                    # (D, D)     out_proj weight, pre-T
    lay["BO"] = r;    r = _align8(r + 1)        # (1, D)
    lay["FOLD"] = r;  r += KV                   # (KV, D)    block-fold matrix
    lay["HSUM"] = r;  r += D                    # (D, H)     per-head sum * scaling
    lay["HEXP"] = r;  r = _align8(r + num_heads)  # (H, D)   per-head expand
    lay["KMASK"] = r; r += MB                   # (MB, KV)   per-edge k-block mask
    lay["VMASK"] = r; r += MB                   # (MB, KV)   per-edge v-block mask
    lay["ROWS"] = r
    return lay, KV


# ----------------------------------- Pallas kernel --------------------------------------
def fused_attn_kernel(edge_ref, x_ref, c_ref, o_ref, *, num_heads, num_types):
    f32 = jnp.float32
    MB = edge_ref.shape[0]                      # edges per block
    NB, D = x_ref.shape                         # nodes per block, hidden
    H = num_heads
    lay, KV = slab_layout(D, num_types, H, MB)
    PW = KV + D
    assert c_ref.shape == (lay["ROWS"], PW)

    x = x_ref[...]                              # (NB, D)
    src = edge_ref[:, 0:1]                      # (MB, 1) int32
    tgt = edge_ref[:, 1:2]                      # (MB, 1) int32

    # one-hot gather/scatter matrices (VPU iota + compare); fine while a whole block
    # fits in VMEM.
    # TODO(synk): sorted-edge segment processing for realistic graph sizes (O(M*D)).
    node_ids = jax.lax.broadcasted_iota(jnp.int32, (MB, NB), 1)
    oh_src = (node_ids == src).astype(f32)      # (MB, NB)
    oh_tgt = (node_ids == tgt).astype(f32)      # (MB, NB)

    # ---- ONE fused lane-dense projection for q and every per-type k/v (MXU) ------------
    w_all = c_ref[lay["W_ALL"]:lay["W_ALL"] + D, :]        # (D, PW)
    b_all = c_ref[lay["B_ALL"]:lay["B_ALL"] + 1, :]        # (1, PW)
    proj = jnp.dot(x, w_all, preferred_element_type=f32) + b_all        # (NB, PW)

    # gather: q' by edge target, stacked typed k/v by edge source (MXU)
    q_prime = jnp.dot(oh_tgt, proj[:, KV:PW], preferred_element_type=f32)   # (MB, D)
    kv_src = jnp.dot(oh_src, proj[:, 0:KV], preferred_element_type=f32)     # (MB, KV)

    # per-edge-type (k, v) block selection: precomputed masks + block-fold matmul
    k_mask = c_ref[lay["KMASK"]:lay["KMASK"] + MB, 0:KV]
    v_mask = c_ref[lay["VMASK"]:lay["VMASK"] + MB, 0:KV]
    fold = c_ref[lay["FOLD"]:lay["FOLD"] + KV, 0:D]                         # (KV, D)
    k_prime = jnp.dot(kv_src * k_mask, fold, preferred_element_type=f32)    # (MB, D)
    v_prime = jnp.dot(kv_src * v_mask, fold, preferred_element_type=f32)    # (MB, D)

    # ---- per-head scores, lane-packed as (MB, H); hsum is pre-scaled by head_dim^-0.5 --
    hsum = c_ref[lay["HSUM"]:lay["HSUM"] + D, 0:H]                          # (D, H)
    scores = jnp.dot(q_prime * k_prime, hsum, preferred_element_type=f32)   # (MB, H)

    # ---- scatter-softmax over edge targets ----------------------------------------------
    # Global per-head max is a valid softmax shift (per-segment constants cancel).
    # TODO(synk): true per-segment max when switching to sorted-edge segment processing.
    gmax = jnp.max(scores, axis=0, keepdims=True)
    e = jnp.exp(scores - gmax)                                              # (MB, H)
    seg_sum = jax.lax.dot_general(oh_tgt, e, (((0,), (0,)), ((), ())),
                                  preferred_element_type=f32)               # (NB, H)
    # EUP approximate reciprocal + one Newton step (keeps f32 accuracy; clamp guards
    # nodes with no incoming edges, whose rows are never gathered back anyway).
    d_safe = jnp.maximum(seg_sum, 1e-30)
    r0 = pl.reciprocal(d_safe, approx=True)
    seg_inv = r0 * (2.0 - d_safe * r0)                                      # (NB, H)
    attn_w = e * jnp.dot(oh_tgt, seg_inv, preferred_element_type=f32)       # (MB, H)

    # ---- expand per-head weights, weight v', scatter-add messages, out_proj (MXU) ------
    hexp = c_ref[lay["HEXP"]:lay["HEXP"] + H, 0:D]                          # (H, D)
    w_full = jnp.dot(attn_w, hexp, preferred_element_type=f32)              # (MB, D)
    per_edge = v_prime * w_full
    attn_out = jax.lax.dot_general(oh_tgt, per_edge, (((0,), (0,)), ((), ())),
                                   preferred_element_type=f32)              # (NB, D)
    wo = c_ref[lay["WO"]:lay["WO"] + D, 0:D]
    bo = c_ref[lay["BO"]:lay["BO"] + 1, 0:D]
    o_ref[...] = jnp.dot(attn_out, wo, preferred_element_type=f32) + bo


# ------------------------------------ host-side packing ----------------------------------
def pack_consts(params, etype, num_heads):
    """Build the single grid-invariant constant slab: weights/biases + selection
    matrices + per-edge-type masks. Done ONCE on the host."""
    D = params["Wq"].shape[0]
    T = len(params["Wk"])
    H = num_heads
    hd = D // H
    MB = int(etype.shape[0])
    lay, KV = slab_layout(D, T, H, MB)
    PW = KV + D

    wcols, bcols = [], []
    for t in range(T):
        wcols += [np.asarray(params["Wk"][t]).T, np.asarray(params["Wv"][t]).T]
        bcols += [np.asarray(params["bk"][t]), np.asarray(params["bv"][t])]
    wcols.append(np.asarray(params["Wq"]).T)
    bcols.append(np.asarray(params["bq"]))
    w_all = np.concatenate(wcols, axis=1)                       # (D, PW)
    b_all = np.concatenate(bcols)                               # (PW,)

    fold = (np.arange(KV)[:, None] % D == np.arange(D)[None, :]).astype(np.float32)
    hsum = ((np.arange(D)[:, None] // hd) == np.arange(H)[None, :]).astype(np.float32)
    hsum *= float(hd) ** -0.5
    hexp = (np.arange(H)[:, None] == (np.arange(D)[None, :] // hd)).astype(np.float32)
    blk = np.arange(KV)[None, :] // D
    k_mask = (blk == 2 * etype[:, None]).astype(np.float32)
    v_mask = (blk == 2 * etype[:, None] + 1).astype(np.float32)

    slab = np.zeros((lay["ROWS"], PW), np.float32)
    slab[lay["W_ALL"]:lay["W_ALL"] + D, :] = w_all
    slab[lay["B_ALL"], :] = b_all
    slab[lay["WO"]:lay["WO"] + D, :D] = np.asarray(params["Wo"]).T
    slab[lay["BO"], :D] = np.asarray(params["bo"])
    slab[lay["FOLD"]:lay["FOLD"] + KV, :D] = fold
    slab[lay["HSUM"]:lay["HSUM"] + D, :H] = hsum
    slab[lay["HEXP"]:lay["HEXP"] + H, :D] = hexp
    slab[lay["KMASK"]:lay["KMASK"] + MB, :KV] = k_mask
    slab[lay["VMASK"]:lay["VMASK"] + MB, :KV] = v_mask
    return jnp.asarray(slab)


def pack_batch(node_states_all, edge_lists_per_graph, graphs_per_block, num_nodes):
    """Pack G graphs into B = G / graphs_per_block blocks with disjoint node-id ranges."""
    G, N, D = node_states_all.shape
    assert N == num_nodes and G % graphs_per_block == 0
    B = G // graphs_per_block
    x_blocks = node_states_all.reshape(B, graphs_per_block * N, D)

    edge_rows, etype_rows = [], []
    for g, edge_lists in enumerate(edge_lists_per_graph):
        local = g % graphs_per_block
        for t, el in enumerate(edge_lists):
            e = np.asarray(el, dtype=np.int32) + local * N
            edge_rows.append(e)
            etype_rows.append(np.full((e.shape[0],), t, dtype=np.int32))
    edges = np.concatenate(edge_rows, axis=0)
    etypes = np.concatenate(etype_rows, axis=0)
    MB = edges.shape[0] // B
    assert MB % 8 == 0, "pad with dummy self-loops on an isolated padding node"
    edges = edges.reshape(B, MB, 2)
    etypes = etypes.reshape(B, MB)
    # masks live in the grid-invariant const slab => type layout must match across blocks
    assert all(np.array_equal(etypes[b], etypes[0]) for b in range(B))
    return x_blocks, jnp.asarray(edges), etypes[0]


# ------------------------------------ pallas wrapper -------------------------------------
def _cost_estimate(B, NB, MB, D, KV, H, const_rows, const_cols):
    PW = KV + D
    mm = (NB * D * PW + MB * NB * D + MB * NB * KV + 2 * MB * KV * D + MB * D * H
          + 2 * MB * NB * H + MB * H * D + MB * NB * D + NB * D * D)
    return pl.CostEstimate(
        flops=2 * B * mm,
        transcendentals=B * (MB * H + NB * H),
        bytes_accessed=4 * (B * (2 * NB * D + 2 * MB) + const_rows * const_cols),
    )


@functools.partial(jax.jit, static_argnames=("num_heads", "num_types"))
def typed_self_attn_forward(edge_blocks, x_blocks, const_slab, *, num_heads, num_types):
    B, NB, D = x_blocks.shape
    MB = edge_blocks.shape[1]
    KV = 2 * num_types * D
    kernel = functools.partial(fused_attn_kernel, num_heads=num_heads,
                               num_types=num_types)
    return pl.pallas_call(
        kernel,
        out_shape=jax.ShapeDtypeStruct((B, NB, D), jnp.float32),
        grid_spec=pltpu.PrefetchScalarGridSpec(
            num_scalar_prefetch=0,
            grid=(B,),
            in_specs=[
                pl.BlockSpec((None, MB, 2), lambda b: (b, 0, 0)),       # edges
                pl.BlockSpec((None, NB, D), lambda b: (b, 0, 0)),       # node states
                pl.BlockSpec(const_slab.shape, lambda b: (0, 0)),       # resident consts
            ],
            out_specs=pl.BlockSpec((None, NB, D), lambda b: (b, 0, 0)),
        ),
        compiler_params=pltpu.CompilerParams(
            dimension_semantics=("parallel",),          # v7x: shard blocks over 2 TCs
            vmem_limit_bytes=32 * 1024 * 1024,
        ),
        cost_estimate=_cost_estimate(B, NB, MB, D, KV, num_heads,
                                     const_slab.shape[0], const_slab.shape[1]),
    )(edge_blocks, x_blocks, const_slab)


# ------------------------------- parameters (deterministic) ------------------------------
def xavier_uniform(key, out_f, in_f, gain=1.0):
    bound = gain * math.sqrt(6.0 / (in_f + out_f))
    return jax.random.uniform(key, (out_f, in_f), jnp.float32, -bound, bound)


def init_params(key):
    keys = jax.random.split(key, 2 + 2 * EDGE_TYPE_COUNT)
    params = {
        "Wq": xavier_uniform(keys[0], HIDDEN, HIDDEN),
        "bq": jnp.zeros((HIDDEN,), jnp.float32),
        "Wo": xavier_uniform(keys[1], HIDDEN, HIDDEN),
        "bo": jnp.zeros((HIDDEN,), jnp.float32),
        "Wk": [], "bk": [], "Wv": [], "bv": [],
    }
    for i in range(EDGE_TYPE_COUNT):
        params["Wk"].append(xavier_uniform(keys[2 + 2 * i], HIDDEN, HIDDEN))
        params["bk"].append(jnp.zeros((HIDDEN,), jnp.float32))
        params["Wv"].append(xavier_uniform(keys[3 + 2 * i], HIDDEN, HIDDEN))
        params["bv"].append(jnp.zeros((HIDDEN,), jnp.float32))
    return params


# ------------------------------- pure-JAX reference (per graph) --------------------------
def ref_forward(params, node_states, edge_lists, *, num_nodes, num_heads):
    D = node_states.shape[1]
    hd = D // num_heads

    def linear(x, w, b):
        return x @ w.T + b

    q = linear(node_states, params["Wq"], params["bq"])
    q_p, k_p, v_p, tgt_l = [], [], [], []
    for i, el in enumerate(edge_lists):
        src, tgt = el[:, 0], el[:, 1]
        tgt_l.append(tgt)
        q_p.append(q[tgt])
        sel = node_states[src]
        k_p.append(linear(sel, params["Wk"][i], params["bk"][i]))
        v_p.append(linear(sel, params["Wv"][i], params["bv"][i]))
    edge_targets = jnp.concatenate(tgt_l, axis=0)
    q_prime = jnp.concatenate(q_p, axis=0)
    k_prime = jnp.concatenate(k_p, axis=0)
    v_prime = jnp.concatenate(v_p, axis=0)

    M = q_prime.shape[0]
    scores = (q_prime * k_prime).reshape(M, num_heads, hd).sum(-1) * float(hd) ** -0.5
    seg_max = jax.ops.segment_max(scores, edge_targets, num_segments=num_nodes)
    e = jnp.exp(scores - seg_max[edge_targets])
    seg_sum = jax.ops.segment_sum(e, edge_targets, num_segments=num_nodes)
    w = e / seg_sum[edge_targets]
    per_edge = (v_prime.reshape(M, num_heads, hd) * w[:, :, None]).reshape(M, D)
    attn_out = jax.ops.segment_sum(per_edge, edge_targets, num_segments=num_nodes)
    return linear(attn_out, params["Wo"], params["bo"])


# ---------------------------------------- main -------------------------------------------
if __name__ == "__main__":
    key = jax.random.PRNGKey(0)
    k_ns, k_e, k_p = jax.random.split(key, 3)

    node_states_all = jax.random.normal(k_ns, (NUM_GRAPHS, NUM_NODES, HIDDEN), jnp.float32)
    edge_keys = jax.random.split(k_e, NUM_GRAPHS * EDGE_TYPE_COUNT)
    edge_lists_per_graph = [
        [jax.random.randint(edge_keys[g * EDGE_TYPE_COUNT + t], (EDGES_PER_TYPE, 2),
                            0, NUM_NODES, jnp.int32)
         for t in range(EDGE_TYPE_COUNT)]
        for g in range(NUM_GRAPHS)
    ]
    params = init_params(k_p)

    # one-time host packing: batch graphs into blocks + build the constant slab
    x_blocks, edge_blocks, etype_block = pack_batch(
        node_states_all, edge_lists_per_graph, GRAPHS_PER_BLOCK, NUM_NODES)
    const_slab = pack_consts(params, np.asarray(etype_block), NUM_HEADS)

    out = typed_self_attn_forward(edge_blocks, x_blocks, const_slab,
                                  num_heads=NUM_HEADS, num_types=EDGE_TYPE_COUNT)
    out = jax.block_until_ready(out)
    assert out.shape == x_blocks.shape

    # reference: run each graph through the pure-JAX reference and reassemble blocks
    B = NUM_GRAPHS // GRAPHS_PER_BLOCK
    ref_blocks = []
    for b in range(B):
        rows = []
        for j in range(GRAPHS_PER_BLOCK):
            g = b * GRAPHS_PER_BLOCK + j
            rows.append(ref_forward(params, node_states_all[g], edge_lists_per_graph[g],
                                    num_nodes=NUM_NODES, num_heads=NUM_HEADS))
        ref_blocks.append(jnp.concatenate(rows, axis=0))
    ref = jnp.stack(ref_blocks, axis=0)

    np.testing.assert_allclose(np.asarray(out), np.asarray(ref), rtol=1e-3, atol=1e-3)
    print("KERNEL_OK")
</pallas_src>

<mosaic_0001>
module attributes {stable_mosaic.version = 11 : i64} {
  func.func @fused_attn_kernel(%arg0: i32, %arg1: memref<1x96x2xi32, #tpu.memory_space<vmem>>, %arg2: memref<1x64x32xf32, #tpu.memory_space<vmem>>, %arg3: memref<440x160xf32, #tpu.memory_space<vmem>>, %arg4: memref<1x64x32xf32, #tpu.memory_space<vmem>>) attributes {dimension_semantics = [#tpu.dimension_semantics<parallel>], iteration_bounds = array<i64: 2>, scalar_prefetch = 0 : i64, scratch_operands = 0 : i64, tpu.core_type = #tpu.core_type<tc>, window_params = [{transform_indices = @transform_0, window_bounds = array<i64: 1, 96, 2>}, {transform_indices = @transform_1, window_bounds = array<i64: 1, 64, 32>}, {pipeline_mode = #tpu.pipeline_mode<synchronous>, transform_indices = @transform_2, window_bounds = array<i64: 440, 160>}, {transform_indices = @transform_3, window_bounds = array<i64: 1, 64, 32>}]} {
    %c0 = arith.constant 0 : index
    %c0_0 = arith.constant 0 : index
    %c0_1 = arith.constant 0 : index
    %0 = vector.load %arg2[%c0, %c0_0, %c0_1] : memref<1x64x32xf32, #tpu.memory_space<vmem>>, vector<1x64x32xf32>
    %1 = vector.shape_cast %0 : vector<1x64x32xf32> to vector<64x32xf32>
    %c0_2 = arith.constant 0 : index
    %c0_3 = arith.constant 0 : index
    %c0_4 = arith.constant 0 : index
    %2 = vector.load %arg1[%c0_2, %c0_3, %c0_4] : memref<1x96x2xi32, #tpu.memory_space<vmem>>, vector<1x96x1xi32>
    %3 = vector.shape_cast %2 : vector<1x96x1xi32> to vector<96x1xi32>
    %c0_5 = arith.constant 0 : index
    %c0_6 = arith.constant 0 : index
    %c1 = arith.constant 1 : index
    %4 = vector.load %arg1[%c0_5, %c0_6, %c1] : memref<1x96x2xi32, #tpu.memory_space<vmem>>, vector<1x96x1xi32>
    %5 = vector.shape_cast %4 : vector<1x96x1xi32> to vector<96x1xi32>
    %6 = tpu.iota {dimensions = array<i32: 1>} : vector<96x64xi32>
    %7 = vector.broadcast %3 : vector<96x1xi32> to vector<96x64xi32>
    %8 = arith.cmpi eq, %6, %7 : vector<96x64xi32>
    %9 = arith.extui %8 : vector<96x64xi1> to vector<96x64xi32>
    %10 = arith.sitofp %9 : vector<96x64xi32> to vector<96x64xf32>
    %11 = vector.broadcast %5 : vector<96x1xi32> to vector<96x64xi32>
    %12 = arith.cmpi eq, %6, %11 : vector<96x64xi32>
    %13 = arith.extui %12 : vector<96x64xi1> to vector<96x64xi32>
    %14 = arith.sitofp %13 : vector<96x64xi32> to vector<96x64xf32>
    %c0_7 = arith.constant 0 : index
    %c0_8 = arith.constant 0 : index
    %15 = vector.load %arg3[%c0_7, %c0_8] : memref<440x160xf32, #tpu.memory_space<vmem>>, vector<32x160xf32>
    %c32 = arith.constant 32 : index
    %c0_9 = arith.constant 0 : index
    %16 = vector.load %arg3[%c32, %c0_9] : memref<440x160xf32, #tpu.memory_space<vmem>>, vector<1x160xf32>
    %cst = arith.constant dense<0.000000e+00> : vector<64x160xf32>
    %17 = tpu.matmul %1, %15, %cst {dimension_numbers = #tpu.dot_dimension_numbers<[1], [0], [0], [1], [0, 0, 1, 1], [], []>} : vector<64x32xf32>, vector<32x160xf32>, vector<64x160xf32> -> vector<64x160xf32>
    %18 = vector.broadcast %16 : vector<1x160xf32> to vector<64x160xf32>
    %19 = arith.addf %17, %18 : vector<64x160xf32>
    %20 = vector.extract_strided_slice %19 {offsets = [0, 128], sizes = [64, 32], strides = [1, 1]} : vector<64x160xf32> to vector<64x32xf32>
    %cst_10 = arith.constant dense<0.000000e+00> : vector<96x32xf32>
    %21 = tpu.matmul %14, %20, %cst_10 {dimension_numbers = #tpu.dot_dimension_numbers<[1], [0], [0], [1], [0, 0, 1, 1], [], []>} : vector<96x64xf32>, vector<64x32xf32>, vector<96x32xf32> -> vector<96x32xf32>
    %22 = vector.extract_strided_slice %19 {offsets = [0, 0], sizes = [64, 128], strides = [1, 1]} : vector<64x160xf32> to vector<64x128xf32>
    %cst_11 = arith.constant dense<0.000000e+00> : vector<96x128xf32>
    %23 = tpu.matmul %10, %22, %cst_11 {dimension_numbers = #tpu.dot_dimension_numbers<[1], [0], [0], [1], [0, 0, 1, 1], [], []>} : vector<96x64xf32>, vector<64x128xf32>, vector<96x128xf32> -> vector<96x128xf32>
    %c248 = arith.constant 248 : index
    %c0_12 = arith.constant 0 : index
    %24 = vector.load %arg3[%c248, %c0_12] : memref<440x160xf32, #tpu.memory_space<vmem>>, vector<96x128xf32>
    %c344 = arith.constant 344 : index
    %c0_13 = arith.constant 0 : index
    %25 = vector.load %arg3[%c344, %c0_13] : memref<440x160xf32, #tpu.memory_space<vmem>>, vector<96x128xf32>
    %c80 = arith.constant 80 : index
    %c0_14 = arith.constant 0 : index
    %26 = vector.load %arg3[%c80, %c0_14] : memref<440x160xf32, #tpu.memory_space<vmem>>, vector<128x32xf32>
    %27 = arith.mulf %23, %24 : vector<96x128xf32>
    %cst_15 = arith.constant dense<0.000000e+00> : vector<96x32xf32>
    %28 = tpu.matmul %27, %26, %cst_15 {dimension_numbers = #tpu.dot_dimension_numbers<[1], [0], [0], [1], [0, 0, 1, 1], [], []>} : vector<96x128xf32>, vector<128x32xf32>, vector<96x32xf32> -> vector<96x32xf32>
    %29 = arith.mulf %23, %25 : vector<96x128xf32>
    %cst_16 = arith.constant dense<0.000000e+00> : vector<96x32xf32>
    %30 = tpu.matmul %29, %26, %cst_16 {dimension_numbers = #tpu.dot_dimension_numbers<[1], [0], [0], [1], [0, 0, 1, 1], [], []>} : vector<96x128xf32>, vector<128x32xf32>, vector<96x32xf32> -> vector<96x32xf32>
    %c208 = arith.constant 208 : index
    %c0_17 = arith.constant 0 : index
    %31 = vector.load %arg3[%c208, %c0_17] : memref<440x160xf32, #tpu.memory_space<vmem>>, vector<32x4xf32>
    %32 = arith.mulf %21, %28 : vector<96x32xf32>
    %cst_18 = arith.constant dense<0.000000e+00> : vector<96x4xf32>
    %33 = tpu.matmul %32, %31, %cst_18 {dimension_numbers = #tpu.dot_dimension_numbers<[1], [0], [0], [1], [0, 0, 1, 1], [], []>} : vector<96x32xf32>, vector<32x4xf32>, vector<96x4xf32> -> vector<96x4xf32>
    %cst_19 = arith.constant dense<0xFF800000> : vector<4xf32>
    %34 = vector.multi_reduction <maximumf>, %33, %cst_19 [0] : vector<96x4xf32> to vector<4xf32>
    %35 = vector.shape_cast %34 : vector<4xf32> to vector<1x4xf32>
    %36 = vector.broadcast %35 : vector<1x4xf32> to vector<96x4xf32>
    %37 = arith.subf %33, %36 : vector<96x4xf32>
    %38 = math.exp %37 : vector<96x4xf32>
    %cst_20 = arith.constant dense<0.000000e+00> : vector<64x4xf32>
    %39 = tpu.matmul %14, %38, %cst_20 {dimension_numbers = #tpu.dot_dimension_numbers<[0], [0], [1], [1], [0, 1, 1, 1], [], []>} : vector<96x64xf32>, vector<96x4xf32>, vector<64x4xf32> -> vector<64x4xf32>
    %cst_21 = arith.constant 1.000000e-30 : f32
    %40 = vector.broadcast %cst_21 : f32 to vector<64x4xf32>
    %41 = arith.maximumf %39, %40 : vector<64x4xf32>
    %42 = tpu.reciprocal %41 {approx = true} : vector<64x4xf32> -> vector<64x4xf32>
    %43 = arith.mulf %41, %42 : vector<64x4xf32>
    %cst_22 = arith.constant 2.000000e+00 : f32
    %44 = vector.broadcast %cst_22 : f32 to vector<64x4xf32>
    %45 = arith.subf %44, %43 : vector<64x4xf32>
    %46 = arith.mulf %42, %45 : vector<64x4xf32>
    %cst_23 = arith.constant dense<0.000000e+00> : vector<96x4xf32>
    %47 = tpu.matmul %14, %46, %cst_23 {dimension_numbers = #tpu.dot_dimension_numbers<[1], [0], [0], [1], [0, 0, 1, 1], [], []>} : vector<96x64xf32>, vector<64x4xf32>, vector<96x4xf32> -> vector<96x4xf32>
    %48 = arith.mulf %38, %47 : vector<96x4xf32>
    %c240 = arith.constant 240 : index
    %c0_24 = arith.constant 0 : index
    %49 = vector.load %arg3[%c240, %c0_24] : memref<440x160xf32, #tpu.memory_space<vmem>>, vector<4x32xf32>
    %cst_25 = arith.constant dense<0.000000e+00> : vector<96x32xf32>
    %50 = tpu.matmul %48, %49, %cst_25 {dimension_numbers = #tpu.dot_dimension_numbers<[1], [0], [0], [1], [0, 0, 1, 1], [], []>} : vector<96x4xf32>, vector<4x32xf32>, vector<96x32xf32> -> vector<96x32xf32>
    %51 = arith.mulf %30, %50 : vector<96x32xf32>
    %cst_26 = arith.constant dense<0.000000e+00> : vector<64x32xf32>
    %52 = tpu.matmul %14, %51, %cst_26 {dimension_numbers = #tpu.dot_dimension_numbers<[0], [0], [1], [1], [0, 1, 1, 1], [], []>} : vector<96x64xf32>, vector<96x32xf32>, vector<64x32xf32> -> vector<64x32xf32>
    %c40 = arith.constant 40 : index
    %c0_27 = arith.constant 0 : index
    %53 = vector.load %arg3[%c40, %c0_27] : memref<440x160xf32, #tpu.memory_space<vmem>>, vector<32x32xf32>
    %c72 = arith.constant 72 : index
    %c0_28 = arith.constant 0 : index
    %54 = vector.load %arg3[%c72, %c0_28] : memref<440x160xf32, #tpu.memory_space<vmem>>, vector<1x32xf32>
    %cst_29 = arith.constant dense<0.000000e+00> : vector<64x32xf32>
    %55 = tpu.matmul %52, %53, %cst_29 {dimension_numbers = #tpu.dot_dimension_numbers<[1], [0], [0], [1], [0, 0, 1, 1], [], []>} : vector<64x32xf32>, vector<32x32xf32>, vector<64x32xf32> -> vector<64x32xf32>
    %56 = vector.broadcast %54 : vector<1x32xf32> to vector<64x32xf32>
    %57 = arith.addf %55, %56 : vector<64x32xf32>
    %c0_30 = arith.constant 0 : index
    %c0_31 = arith.constant 0 : index
    %c0_32 = arith.constant 0 : index
    %58 = vector.load %arg4[%c0_30, %c0_31, %c0_32] : memref<1x64x32xf32, #tpu.memory_space<vmem>>, vector<1x64x32xf32>
    %59 = vector.shape_cast %58 : vector<1x64x32xf32> to vector<64x32xf32>
    %60 = vector.shape_cast %57 : vector<64x32xf32> to vector<1x64x32xf32>
    tpu.vector_store %arg4[%c0_30, %c0_31, %c0_32], %60 {strides = array<i32>} : memref<1x64x32xf32, #tpu.memory_space<vmem>>, vector<1x64x32xf32>,
    return
  }
  func.func @transform_0(%arg0: i32) -> (i32, i32, i32) {
    %c0_i32 = arith.constant 0 : i32
    %c0_i32_0 = arith.constant 0 : i32
    %c0_i32_1 = arith.constant 0 : i32
    return %arg0, %c0_i32, %c0_i32_0 : i32, i32, i32
  }
  func.func @transform_1(%arg0: i32) -> (i32, i32, i32) {
    %c0_i32 = arith.constant 0 : i32
    %c0_i32_0 = arith.constant 0 : i32
    %c0_i32_1 = arith.constant 0 : i32
    return %arg0, %c0_i32, %c0_i32_0 : i32, i32, i32
  }
  func.func @transform_2(%arg0: i32) -> (i32, i32) {
    %c0_i32 = arith.constant 0 : i32
    %c0_i32_0 = arith.constant 0 : i32
    %c0_i32_1 = arith.constant 0 : i32
    return %c0_i32, %c0_i32_0 : i32, i32
  }
  func.func @transform_3(%arg0: i32) -> (i32, i32, i32) {
    %c0_i32 = arith.constant 0 : i32
    %c0_i32_0 = arith.constant 0 : i32
    %c0_i32_1 = arith.constant 0 : i32
    return %arg0, %c0_i32, %c0_i32_0 : i32, i32, i32
  }
}

</mosaic_0001>

<llo_original>
// kernel: typed_self_attn_forward.1
$region0: #{typed_self_attn_forward.1}
  #allocation0 [shape = 'u32[]', space=smem, size = 0x4, offset = 0x4, fixed_abs, tag = 'smem constant byte address 0x4 - core index']
  #allocation1 [shape = 'u32[144,128]{1,0:T(1,128)}', space=vmem, size = 0x12000, scoped, tag = 'internal scratch']
  %s0 = inlined_call_operand.vmem [shape: s32[2,96,2], index: 0, kind: input, shape index: {}]
  %s1 = inlined_call_operand.vmem [shape: f32[2,64,32], index: 1, kind: input, shape index: {}]
  %s2 = inlined_call_operand.vmem [shape: f32[440,160], index: 2, kind: input, shape index: {}]
  %s3 = inlined_call_operand.vmem [shape: f32[2,64,32], index: 3, kind: output, shape index: {}]
  %s4 = sld [smem:[#allocation0]]
  $region45: #{typed_self_attn_forward.1} parent=0
    _
  %s6 = ssub.s32 1, %s4
  %s7 = scalar_select 0, %s6, %s4
  loop: start=0, step=1, limit=4
  $region2: #{typed_self_attn_forward.1} parent=0 // loop_pre_header
    _
  $region3: #{typed_self_attn_forward.1} parent=0 // loop_header
    %s9 = sphi 0, %s13
    %p10 = scmp.ge.s32.totalorder %s9, 4
    %s19 = sphi 0, %s21
    %s22 = sphi 0, %s19
    %s23 = sphi 0, %s22
    %s39 = sphi 0, %s23
    %s45 = sphi 0, %s47
    %s48 = sphi 0, %s45
    %s49 = sphi 0, %s48
    %s65 = sphi 0, %s49
    %s69 = sphi 0, %s69
    %s71 = sphi 0, %s69
    %s72 = sphi 0, %s71
    %s86 = sphi 0, %s72
    %s92 = sphi 0, %s94
    %s95 = sphi 0, %s92
    %s96 = sphi 0, %s95
    %s112 = sphi 0, %s96
  $region4: #{typed_self_attn_forward.1} parent=0 // loop_header_branch
    %12 = sbr.rel (%p10) target = $region8
  $region5: #{typed_self_attn_forward.1} parent=0 // loop_body
    %s14 = ssub.s32 %s9, 1
    %s15 = ssub.s32 %s9, 2
    %s16 = sadd.s32 %s9, 1
    %s17 = ssub.s32 %s9, %s16
    %p18 = scmp.eq.s32.totalorder %s17, 0
    %s20 = sadd.s32 %s19, 1
    %s21 = scalar_select %p18, %s19, %s20
    %p24 = pneg %p18
    %p25 = scmp.eq.s32.totalorder %s9, 1
    %p26 = por %p24, %p25
    %p27 = scmp.ne.s32.totalorder %s19, %s22
    %p28 = scmp.eq.s32.totalorder %s9, 0
    %p29 = por %p27, %p28
    %p30 = scmp.ne.s32.totalorder %s19, %s22
    %p31 = scmp.eq.s32.totalorder %s14, 1
    %p32 = por %p30, %p31
    %p33 = scmp.ne.s32.totalorder %s22, %s23
    %p34 = scmp.eq.s32.totalorder %s14, 0
    %p35 = por %p33, %p34
    %p36 = scmp.ne.s32.totalorder %s22, %s23
    %p37 = scmp.eq.s32.totalorder %s15, 1
    %p38 = por %p36, %p37
    %p40 = scmp.ne.s32.totalorder %s23, %s39
    %p41 = scmp.eq.s32.totalorder %s15, 0
    %p42 = por %p40, %p41
    %s43 = ssub.s32 %s9, %s16
    %p44 = scmp.eq.s32.totalorder %s43, 0
    %s46 = sadd.s32 %s45, 1
    %s47 = scalar_select %p44, %s45, %s46
    %p50 = pneg %p44
    %p51 = scmp.eq.s32.totalorder %s9, 1
    %p52 = por %p50, %p51
    %p53 = scmp.ne.s32.totalorder %s45, %s48
    %p54 = scmp.eq.s32.totalorder %s9, 0
    %p55 = por %p53, %p54
    %p56 = scmp.ne.s32.totalorder %s45, %s48
    %p57 = scmp.eq.s32.totalorder %s14, 1
    %p58 = por %p56, %p57
    %p59 = scmp.ne.s32.totalorder %s48, %s49
    %p60 = scmp.eq.s32.totalorder %s14, 0
    %p61 = por %p59, %p60
    %p62 = scmp.ne.s32.totalorder %s48, %s49
    %p63 = scmp.eq.s32.totalorder %s15, 1
    %p64 = por %p62, %p63
    %p66 = scmp.ne.s32.totalorder %s49, %s65
    %p67 = scmp.eq.s32.totalorder %s15, 0
    %p68 = por %p66, %p67
    %s70 = sadd.s32 %s69, 1
    %p73 = scmp.eq.s32.totalorder %s9, 1
    %p74 = scmp.ne.s32.totalorder %s69, %s71
    %p75 = scmp.eq.s32.totalorder %s9, 0
    %p76 = por %p74, %p75
    %p77 = scmp.ne.s32.totalorder %s69, %s71
    %p78 = scmp.eq.s32.totalorder %s14, 1
    %p79 = por %p77, %p78
    %p80 = scmp.ne.s32.totalorder %s71, %s72
    %p81 = scmp.eq.s32.totalorder %s14, 0
    %p82 = por %p80, %p81
    %p83 = scmp.ne.s32.totalorder %s71, %s72
    %p84 = scmp.eq.s32.totalorder %s15, 1
    %p85 = por %p83, %p84
    %p87 = scmp.ne.s32.totalorder %s72, %s86
    %p88 = scmp.eq.s32.totalorder %s15, 0
    %p89 = por %p87, %p88
    %s90 = ssub.s32 %s9, %s16
    %p91 = scmp.eq.s32.totalorder %s90, 0
    %s93 = sadd.s32 %s92, 1
    %s94 = scalar_select %p91, %s92, %s93
    %p97 = pneg %p91
    %p98 = scmp.eq.s32.totalorder %s9, 1
    %p99 = por %p97, %p98
    %p100 = scmp.ne.s32.totalorder %s92, %s95
    %p101 = scmp.eq.s32.totalorder %s9, 0
    %p102 = por %p100, %p101
    %p103 = scmp.ne.s32.totalorder %s92, %s95
    %p104 = scmp.eq.s32.totalorder %s14, 1
    %p105 = por %p103, %p104
    %p106 = scmp.ne.s32.totalorder %s95, %s96
    %p107 = scmp.eq.s32.totalorder %s14, 0
    %p108 = por %p106, %p107
    %p109 = scmp.ne.s32.totalorder %s95, %s96
    %p110 = scmp.eq.s32.totalorder %s15, 1
    %p111 = por %p109, %p110
    %p113 = scmp.ne.s32.totalorder %s96, %s112
    %p114 = scmp.eq.s32.totalorder %s15, 0
    %p115 = por %p113, %p114
    %p116 = scmp.le.s32.totalorder 1, %s9
    %p117 = scmp.lt.s32.totalorder %s9, 3
    %p118 = pnand %p116, %p117
    %p119 = pneg %p118
    // Predicated region
    $region9: #{typed_self_attn_forward.1} parent=5 // pred_check
      _
    $region10: #{typed_self_attn_forward.1} parent=5 // pred_check_branch
      %121 = sbr.rel (%p118) target = $region12
    $region11: #{typed_self_attn_forward.1} parent=5 // pred_region
      %s122 = ssub.s32 %s9, 1
      // Predicated region
      $region13: #{typed_self_attn_forward.1} parent=11 // pred_check
        %p123 = pneg %p82
      $region14: #{typed_self_attn_forward.1} parent=11 // pred_check_branch
        %125 = sbr.rel (%p123) target = $region16
      $region15: #{typed_self_attn_forward.1} parent=11 // pred_region
        _
      $region16: #{typed_self_attn_forward.1} parent=11 // pred_fallthru
        _
    $region12: #{typed_self_attn_forward.1} parent=5 // pred_fallthru
      _
    %p126 = scmp.lt.s32.totalorder %s9, 2
    // Predicated region
    $region17: #{typed_self_attn_forward.1} parent=5 // pred_check
      %p127 = pneg %p126
    $region18: #{typed_self_attn_forward.1} parent=5 // pred_check_branch
      %129 = sbr.rel (%p127) target = $region20
    $region19: #{typed_self_attn_forward.1} parent=5 // pred_region
      // Predicated region
      $region21: #{typed_self_attn_forward.1} parent=19 // pred_check
        %p130 = pneg %p29
      $region22: #{typed_self_attn_forward.1} parent=19 // pred_check_branch
        %132 = sbr.rel (%p130) target = $region24
      $region23: #{typed_self_attn_forward.1} parent=19 // pred_region
        %p133 = scmp.lt.s32.totalorder %s9, 1
        %s134 = scalar_select %p133, %s9, 1
        %s135 = smul.addr %s134, 12
        %s136 = smul.addr %s135, 8
        %s137 = scalar_lea.vmem %s0, %s136
      $region24: #{typed_self_attn_forward.1} parent=19 // pred_fallthru
        _
      // Predicated region
      $region25: #{typed_self_attn_forward.1} parent=19 // pred_check
        %p138 = pneg %p55
      $region26: #{typed_self_attn_forward.1} parent=19 // pred_check_branch
        %140 = sbr.rel (%p138) target = $region28
      $region27: #{typed_self_attn_forward.1} parent=19 // pred_region
        %p141 = scmp.lt.s32.totalorder %s9, 1
        %s142 = scalar_select %p141, %s9, 1
        %s143 = smul.addr %s142, 8
        %s144 = smul.addr %s143, 8
        %s145 = scalar_lea.vmem %s1, %s144
      $region28: #{typed_self_attn_forward.1} parent=19 // pred_fallthru
        _
    $region20: #{typed_self_attn_forward.1} parent=5 // pred_fallthru
      _
    %p146 = scmp.le.s32.totalorder 1, %s9
    %p147 = scmp.lt.s32.totalorder %s9, 3
    %p148 = pnand %p146, %p147
    %p149 = pneg %p148
    // Predicated region
    $region29: #{typed_self_attn_forward.1} parent=5 // pred_check
      _
    $region30: #{typed_self_attn_forward.1} parent=5 // pred_check_branch
      %151 = sbr.rel (%p148) target = $region32
    $region31: #{typed_self_attn_forward.1} parent=5 // pred_region
      %s152 = ssub.s32 %s9, 1
      %p153 = scmp.lt.s32.totalorder %s14, 1
      %s154 = scalar_select %p153, %s14, 1
      %s155 = smul.addr %s154, 12
      %s156 = smul.addr %s155, 8
      %s157 = scalar_lea.vmem %s0, %s156
      %p158 = pneg %p35
      %p159 = pneg %p32
      %p160 = scmp.lt.s32.totalorder %s14, 1
      %s161 = scalar_select %p160, %s14, 1
      %s162 = smul.addr %s161, 8
      %s163 = smul.addr %s162, 8
      %s164 = scalar_lea.vmem %s1, %s163
      %p165 = pneg %p61
      %p166 = pneg %p58
      %p167 = pneg %p82
      %p168 = pneg %p79
      %p169 = pneg %p108
      %p170 = pneg %p105
      %p171 = scmp.lt.s32.totalorder %s14, 1
      %s172 = scalar_select %p171, %s14, 1
      %s173 = smul.addr %s172, 8
      %s174 = smul.addr %s173, 8
      %s175 = scalar_lea.vmem %s3, %s174
      %p176 = scmp.lt.s32.totalorder %s14, 1
      %s177 = scalar_select %p176, %s14, 1
      %s178 = smul.addr %s177, 12
      %s179 = smul.addr %s178, 8
      %s180 = scalar_lea.vmem %s0, %s179
      %p181 = scmp.lt.s32.totalorder %s14, 1
      %s182 = scalar_select %p181, %s14, 1
      %s183 = smul.addr %s182, 8
      %s184 = smul.addr %s183, 8
      %s185 = scalar_lea.vmem %s1, %s184
      %p186 = scmp.lt.s32.totalorder %s14, 1
      %s187 = scalar_select %p186, %s14, 1
      %s188 = smul.addr %s187, 8
      %s189 = smul.addr %s188, 8
      %s190 = scalar_lea.vmem %s3, %s189
      %v191 = vld [vmem:[%s185] sm:$0xff]
      %v192 = vld [vmem:[%s185 + $0x8] sm:$0xff]
      %v193 = vld [vmem:[%s185 + $0x10] sm:$0xff]
      %v194 = vld [vmem:[%s185 + $0x18] sm:$0xff]
      %v195 = vld [vmem:[%s185 + $0x20] sm:$0xff]
      %v196 = vld [vmem:[%s185 + $0x28] sm:$0xff]
      %v197 = vld [vmem:[%s185 + $0x30] sm:$0xff]
      %v198 = vld [vmem:[%s185 + $0x38] sm:$0xff]
      %v199 = vld [vmem:[%s180] sm:$0xff]
      %v200 = vld [vmem:[%s180 + $0x8] sm:$0xff]
      %v201 = vld [vmem:[%s180 + $0x10] sm:$0xff]
      %v202 = vld [vmem:[%s180 + $0x18] sm:$0xff]
      %v203 = vld [vmem:[%s180 + $0x20] sm:$0xff]
      %v204 = vld [vmem:[%s180 + $0x28] sm:$0xff]
      %v205 = vld [vmem:[%s180 + $0x30] sm:$0xff]
      %v206 = vld [vmem:[%s180 + $0x38] sm:$0xff]
      %v207 = vld [vmem:[%s180 + $0x40] sm:$0xff]
      %v208 = vld [vmem:[%s180 + $0x48] sm:$0xff]
      %v209 = vld [vmem:[%s180 + $0x50] sm:$0xff]
      %v210 = vld [vmem:[%s180 + $0x58] sm:$0xff]
      %v211 = vlaneseq
      %v212 = vand.u32 %v211, 127
      %213 = vset.pattern.permute.xlu0 0
      %214 = vperm.xlu0 %213, %v199
      %v215 = vpop.permute.xlu0 %214
      %216 = vset.pattern.permute.xlu0 0
      %217 = vperm.xlu0 %216, %v200
      %v218 = vpop.permute.xlu0 %217
      %219 = vset.pattern.permute.xlu0 0
      %220 = vperm.xlu0 %219, %v201
      %v221 = vpop.permute.xlu0 %220
      %222 = vset.pattern.permute.xlu0 0
      %223 = vperm.xlu0 %222, %v202
      %v224 = vpop.permute.xlu0 %223
      %225 = vset.pattern.permute.xlu0 0
      %226 = vperm.xlu0 %225, %v203
      %v227 = vpop.permute.xlu0 %226
      %228 = vset.pattern.permute.xlu0 0
      %229 = vperm.xlu0 %228, %v204
      %v230 = vpop.permute.xlu0 %229
      %231 = vset.pattern.permute.xlu0 0
      %232 = vperm.xlu0 %231, %v205
      %v233 = vpop.permute.xlu0 %232
      %234 = vset.pattern.permute.xlu0 0
      %235 = vperm.xlu0 %234, %v206
      %v236 = vpop.permute.xlu0 %235
      %237 = vset.pattern.permute.xlu0 0
      %238 = vperm.xlu0 %237, %v207
      %v239 = vpop.permute.xlu0 %238
      %240 = vset.pattern.permute.xlu0 0
      %241 = vperm.xlu0 %240, %v208
      %v242 = vpop.permute.xlu0 %241
      %243 = vset.pattern.permute.xlu0 0
      %244 = vperm.xlu0 %243, %v209
      %v245 = vpop.permute.xlu0 %244
      %246 = vset.pattern.permute.xlu0 0
      %247 = vperm.xlu0 %246, %v210
      %v248 = vpop.permute.xlu0 %247
      %vm249 = vcmp.eq.s32.totalorder %v212, %v215
      %vm250 = vcmp.eq.s32.totalorder %v212, %v218
      %vm251 = vcmp.eq.s32.totalorder %v212, %v221
      %vm252 = vcmp.eq.s32.totalorder %v212, %v224
      %vm253 = vcmp.eq.s32.totalorder %v212, %v227
      %vm254 = vcmp.eq.s32.totalorder %v212, %v230
      %vm255 = vcmp.eq.s32.totalorder %v212, %v233
      %vm256 = vcmp.eq.s32.totalorder %v212, %v236
      %vm257 = vcmp.eq.s32.totalorder %v212, %v239
      %vm258 = vcmp.eq.s32.totalorder %v212, %v242
      %vm259 = vcmp.eq.s32.totalorder %v212, %v245
      %vm260 = vcmp.eq.s32.totalorder %v212, %v248
      %v261 = vsel %vm249, 1, 0
      %v262 = vsel %vm250, 1, 0
      %v263 = vsel %vm251, 1, 0
      %v264 = vsel %vm252, 1, 0
      %v265 = vsel %vm253, 1, 0
      %v266 = vsel %vm254, 1, 0
      %v267 = vsel %vm255, 1, 0
      %v268 = vsel %vm256, 1, 0
      %v269 = vsel %vm257, 1, 0
      %v270 = vsel %vm258, 1, 0
      %v271 = vsel %vm259, 1, 0
      %v272 = vsel %vm260, 1, 0
      %v273 = vcvt.s32.f32 %v261
      %v274 = vcvt.s32.f32 %v262
      %v275 = vcvt.s32.f32 %v263
      %v276 = vcvt.s32.f32 %v264
      %v277 = vcvt.s32.f32 %v265
      %v278 = vcvt.s32.f32 %v266
      %v279 = vcvt.s32.f32 %v267
      %v280 = vcvt.s32.f32 %v268
      %v281 = vcvt.s32.f32 %v269
      %v282 = vcvt.s32.f32 %v270
      %v283 = vcvt.s32.f32 %v271
      %v284 = vcvt.s32.f32 %v272
      %285 = vset.pattern.permute.xlu0 1
      %286 = vperm.xlu0 %285, %v199
      %v287 = vpop.permute.xlu0 %286
      %288 = vset.pattern.permute.xlu0 1
      %289 = vperm.xlu0 %288, %v200
      %v290 = vpop.permute.xlu0 %289
      %291 = vset.pattern.permute.xlu0 1
      %292 = vperm.xlu0 %291, %v201
      %v293 = vpop.permute.xlu0 %292
      %294 = vset.pattern.permute.xlu0 1
      %295 = vperm.xlu0 %294, %v202
      %v296 = vpop.permute.xlu0 %295
      %297 = vset.pattern.permute.xlu0 1
      %298 = vperm.xlu0 %297, %v203
      %v299 = vpop.permute.xlu0 %298
      %300 = vset.pattern.permute.xlu0 1
      %301 = vperm.xlu0 %300, %v204
      %v302 = vpop.permute.xlu0 %301
      %303 = vset.pattern.permute.xlu0 1
      %304 = vperm.xlu0 %303, %v205
      %v305 = vpop.permute.xlu0 %304
      %306 = vset.pattern.permute.xlu0 1
      %307 = vperm.xlu0 %306, %v206
      %v308 = vpop.permute.xlu0 %307
      %309 = vset.pattern.permute.xlu0 1
      %310 = vperm.xlu0 %309, %v207
      %v311 = vpop.permute.xlu0 %310
      %312 = vset.pattern.permute.xlu0 1
      %313 = vperm.xlu0 %312, %v208
      %v314 = vpop.permute.xlu0 %313
      %315 = vset.pattern.permute.xlu0 1
      %316 = vperm.xlu0 %315, %v209
      %v317 = vpop.permute.xlu0 %316
      %318 = vset.pattern.permute.xlu0 1
      %319 = vperm.xlu0 %318, %v210
      %v320 = vpop.permute.xlu0 %319
      %vm321 = vcmp.eq.s32.totalorder %v212, %v287
      %vm322 = vcmp.eq.s32.totalorder %v212, %v290
      %vm323 = vcmp.eq.s32.totalorder %v212, %v293
      %vm324 = vcmp.eq.s32.totalorder %v212, %v296
      %vm325 = vcmp.eq.s32.totalorder %v212, %v299
      %vm326 = vcmp.eq.s32.totalorder %v212, %v302
      %vm327 = vcmp.eq.s32.totalorder %v212, %v305
      %vm328 = vcmp.eq.s32.totalorder %v212, %v308
      %vm329 = vcmp.eq.s32.totalorder %v212, %v311
      %vm330 = vcmp.eq.s32.totalorder %v212, %v314
      %vm331 = vcmp.eq.s32.totalorder %v212, %v317
      %vm332 = vcmp.eq.s32.totalorder %v212, %v320
      %v333 = vsel %vm321, 1, 0
      %v334 = vsel %vm322, 1, 0
      %v335 = vsel %vm323, 1, 0
      %v336 = vsel %vm324, 1, 0
      %v337 = vsel %vm325, 1, 0
      %v338 = vsel %vm326, 1, 0
      %v339 = vsel %vm327, 1, 0
      %v340 = vsel %vm328, 1, 0
      %v341 = vsel %vm329, 1, 0
      %v342 = vsel %vm330, 1, 0
      %v343 = vsel %vm331, 1, 0
      %v344 = vsel %vm332, 1, 0
      %v345 = vcvt.s32.f32 %v333
      %v346 = vcvt.s32.f32 %v334
      %v347 = vcvt.s32.f32 %v335
      %v348 = vcvt.s32.f32 %v336
      %v349 = vcvt.s32.f32 %v337
      %v350 = vcvt.s32.f32 %v338
      %v351 = vcvt.s32.f32 %v339
      %v352 = vcvt.s32.f32 %v340
      %v353 = vcvt.s32.f32 %v341
      %v354 = vcvt.s32.f32 %v342
      %v355 = vcvt.s32.f32 %v343
      %v356 = vcvt.s32.f32 %v344
      %v357 = vld [vmem:[%s2] sm:$0xff]
      %v358 = vld [vmem:[%s2 + $0x8] sm:$0xff]
      %v359 = vld [vmem:[%s2 + $0x10] sm:$0xff]
      %v360 = vld [vmem:[%s2 + $0x18] sm:$0xff]
      %v361 = vld [vmem:[%s2 + $0x20] sm:$0xff]
      %v362 = vld [vmem:[%s2 + $0x28] sm:$0xff]
      %v363 = vld [vmem:[%s2 + $0x30] sm:$0xff]
      %v364 = vld [vmem:[%s2 + $0x38] sm:$0xff]
      %s365 = scalar_lea.vmem %s2, 64
      %v366 = vld [vmem:[%s365] ss:$8 sm:$0x3]
      %v368 = vlaneseq
      %v369 = vshrl.u32 %v368, 7
      %v370 = vsub.s32 0, %v369
      %v371 = vrot.slane %v366, %v370
      %v372 = vlaneseq
      %v373 = vshrl.u32 %v372, 7
      %v374 = vsub.s32 1, %v373
      %v375 = vrot.slane %v366, %v374
      %vm378 = vcmask 261120
      %v380 = vsel %vm378, %v191, 0
      %v383 = vsel %vm378, %v192, 0
      %v386 = vsel %vm378, %v193, 0
      %v389 = vsel %vm378, %v194, 0
      %v392 = vsel %vm378, %v195, 0
      %v395 = vsel %vm378, %v196, 0
      %v398 = vsel %vm378, %v197, 0
      %v401 = vsel %vm378, %v198, 0
      %403 = vmatprep.subr.mxu0 0.0
      %404 = vmatpush1.msra.mxu0 0.0
      %405 = vmatprep.subr.mxu0 0.0
      %406 = vmatpush1.msra.mxu0 0.0
      %407 = vmatprep.subr.mxu0 0.0
      %408 = vmatpush1.msra.mxu0 0.0
      %409 = vmatprep.subr.mxu0 0.0
      %410 = vmatpush1.msra.mxu0 0.0
      %411 = vmatprep.subr.mxu0 0.0
      %412 = vmatpush1.msra.mxu0 0.0
      %413 = vmatprep.subr.mxu0 0.0
      %414 = vmatpush1.msra.mxu0 0.0
      %415 = vmatprep.subr.mxu0 0.0
      %416 = vmatpush1.msra.mxu0 0.0
      %417 = vmatprep.subr.mxu0 0.0
      %418 = vmatpush1.msra.mxu0 0.0
      %419 = vmatprep.subr.mxu0 0.0
      %420 = vmatpush1.msra.mxu0 0.0
      %421 = vmatprep.subr.mxu0 0.0
      %422 = vmatpush1.msra.mxu0 0.0
      %423 = vmatprep.subr.mxu0 0.0
      %424 = vmatpush1.msra.mxu0 0.0
      %425 = vmatprep.subr.mxu0 0.0
      %426 = vmatpush1.msra.mxu0 0.0
      %427 = vmatprep.subr.mxu0 %v364
      %428 = vmatpush1.msra.mxu0 %v363
      %429 = vmatprep.subr.mxu0 %v362
      %430 = vmatpush1.msra.mxu0 %v361
      %431 = vmatprep.subr.mxu0 %v360
      %432 = vmatpush1.msra.mxu0 %v359
      %433 = vmatprep.subr.mxu0 %v358
      %434 = vmatpush1.msra.mxu0 %v357
      %435 = vmatprep.subr.mxu0 0.0
      %436 = vmatpush2.msra.mxu0 0.0
      %437 = vmatprep.subr.mxu0 0.0
      %438 = vmatpush2.msra.mxu0 0.0
      %439 = vmatprep.subr.mxu0 0.0
      %440 = vmatpush2.msra.mxu0 0.0
      %441 = vmatprep.subr.mxu0 0.0
      %442 = vmatpush2.msra.mxu0 0.0
      %443 = vmatprep.subr.mxu0 0.0
      %444 = vmatpush2.msra.mxu0 0.0
      %445 = vmatprep.subr.mxu0 0.0
      %446 = vmatpush2.msra.mxu0 0.0
      %447 = vmatprep.subr.mxu0 0.0
      %448 = vmatpush2.msra.mxu0 0.0
      %449 = vmatprep.subr.mxu0 0.0
      %450 = vmatpush2.msra.mxu0 0.0
      %451 = vmatprep.subr.mxu0 0.0
      %452 = vmatpush2.msra.mxu0 0.0
      %453 = vmatprep.subr.mxu0 0.0
      %454 = vmatpush2.msra.mxu0 0.0
      %455 = vmatprep.subr.mxu0 0.0
      %456 = vmatpush2.msra.mxu0 0.0
      %457 = vmatprep.subr.mxu0 0.0
      %458 = vmatpush2.msra.mxu0 0.0
      %459 = vmatprep.subr.mxu0 0.0
      %460 = vmatpush2.msra.mxu0 0.0
      %461 = vmatprep.subr.mxu0 0.0
      %462 = vmatpush2.msra.mxu0 0.0
      %463 = vmatprep.subr.mxu0 0.0
      %464 = vmatpush2.msra.mxu0 0.0
      %465 = vmatprep.subr.mxu0 0.0
      %466 = vmatpush2.msra.mxu0 0.0
      %467 = vmatprep.mubr.f32.mxu0 0.0
      %468 = vmatmul.mubr.f32.gmra.mxu0 %v380
      %v469 = vpop.f32.mrf.mxu0
      %v470 = vadd.f32 %v371, %v469
      %v471 = vpop.f32.mrf.mxu0
      %v472 = vadd.f32 %v375, %v471
      %473 = vmatprep.mubr.f32.mxu0 0.0
      %474 = vmatmul.mubr.f32.gmra.mxu0 %v383
      %v475 = vpop.f32.mrf.mxu0
      %v476 = vadd.f32 %v371, %v475
      %v477 = vpop.f32.mrf.mxu0
      %v478 = vadd.f32 %v375, %v477
      %479 = vmatprep.mubr.f32.mxu0 0.0
      %480 = vmatmul.mubr.f32.gmra.mxu0 %v386
      %v481 = vpop.f32.mrf.mxu0
      %v482 = vadd.f32 %v371, %v481
      %v483 = vpop.f32.mrf.mxu0
      %v484 = vadd.f32 %v375, %v483
      %485 = vmatprep.mubr.f32.mxu0 0.0
      %486 = vmatmul.mubr.f32.gmra.mxu0 %v389
      %v487 = vpop.f32.mrf.mxu0
      %v488 = vadd.f32 %v371, %v487
      %v489 = vpop.f32.mrf.mxu0
      %v490 = vadd.f32 %v375, %v489
      %491 = vmatprep.mubr.f32.mxu0 0.0
      %492 = vmatmul.mubr.f32.gmra.mxu0 %v392
      %v493 = vpop.f32.mrf.mxu0
      %v494 = vadd.f32 %v371, %v493
      %v495 = vpop.f32.mrf.mxu0
      %v496 = vadd.f32 %v375, %v495
      %497 = vmatprep.mubr.f32.mxu0 0.0
      %498 = vmatmul.mubr.f32.gmra.mxu0 %v395
      %v499 = vpop.f32.mrf.mxu0
      %v500 = vadd.f32 %v371, %v499
      %v501 = vpop.f32.mrf.mxu0
      %v502 = vadd.f32 %v375, %v501
      %503 = vmatprep.mubr.f32.mxu0 0.0
      %504 = vmatmul.mubr.f32.gmra.mxu0 %v398
      %v505 = vpop.f32.mrf.mxu0
      %v506 = vadd.f32 %v371, %v505
      %v507 = vpop.f32.mrf.mxu0
      %v508 = vadd.f32 %v375, %v507
      %509 = vmatprep.mubr.f32.mxu0 0.0
      %510 = vmatmul.mubr.f32.gmra.mxu0 %v401
      %v511 = vpop.f32.mrf.mxu0
      %v512 = vadd.f32 %v371, %v511
      %v513 = vpop.f32.mrf.mxu0
      %v514 = vadd.f32 %v375, %v513
      %515 = vdwg.mxu0
      %vm516 = vcmask 523264
      %v518 = vsel %vm516, %v345, 0
      %v521 = vsel %vm516, %v346, 0
      %v524 = vsel %vm516, %v347, 0
      %v527 = vsel %vm516, %v348, 0
      %v530 = vsel %vm516, %v349, 0
      %v533 = vsel %vm516, %v350, 0
      %v536 = vsel %vm516, %v351, 0
      %v539 = vsel %vm516, %v352, 0
      %v542 = vsel %vm516, %v353, 0
      %v545 = vsel %vm516, %v354, 0
      %v548 = vsel %vm516, %v355, 0
      %v551 = vsel %vm516, %v356, 0
      %553 = vmatprep.subr.mxu0 0.0
      %554 = vmatpush1.msra.mxu0 0.0
      %555 = vmatprep.subr.mxu0 0.0
      %556 = vmatpush1.msra.mxu0 0.0
      %557 = vmatprep.subr.mxu0 0.0
      %558 = vmatpush1.msra.mxu0 0.0
      %559 = vmatprep.subr.mxu0 0.0
      %560 = vmatpush1.msra.mxu0 0.0
      %561 = vmatprep.subr.mxu0 0.0
      %562 = vmatpush1.msra.mxu0 0.0
      %563 = vmatprep.subr.mxu0 0.0
      %564 = vmatpush1.msra.mxu0 0.0
      %565 = vmatprep.subr.mxu0 0.0
      %566 = vmatpush1.msra.mxu0 0.0
      %567 = vmatprep.subr.mxu0 0.0
      %568 = vmatpush1.msra.mxu0 0.0
      %569 = vmatprep.subr.mxu0 0.0
      %570 = vmatpush1.msra.mxu0 %v514
      %571 = vmatprep.subr.mxu0 0.0
      %572 = vmatpush1.msra.mxu0 %v508
      %573 = vmatprep.subr.mxu0 0.0
      %574 = vmatpush1.msra.mxu0 %v502
      %575 = vmatprep.subr.mxu0 0.0
      %576 = vmatpush1.msra.mxu0 %v496
      %577 = vmatprep.subr.mxu0 0.0
      %578 = vmatpush1.msra.mxu0 %v490
      %579 = vmatprep.subr.mxu0 0.0
      %580 = vmatpush1.msra.mxu0 %v484
      %581 = vmatprep.subr.mxu0 0.0
      %582 = vmatpush1.msra.mxu0 %v478
      %583 = vmatprep.subr.mxu0 0.0
      %584 = vmatpush1.msra.mxu0 %v472
      %585 = vmatprep.subr.mxu0 0.0
      %586 = vmatpush2.msra.mxu0 0.0
      %587 = vmatprep.subr.mxu0 0.0
      %588 = vmatpush2.msra.mxu0 0.0
      %589 = vmatprep.subr.mxu0 0.0
      %590 = vmatpush2.msra.mxu0 0.0
      %591 = vmatprep.subr.mxu0 0.0
      %592 = vmatpush2.msra.mxu0 0.0
      %593 = vmatprep.subr.mxu0 0.0
      %594 = vmatpush2.msra.mxu0 0.0
      %595 = vmatprep.subr.mxu0 0.0
      %596 = vmatpush2.msra.mxu0 0.0
      %597 = vmatprep.subr.mxu0 0.0
      %598 = vmatpush2.msra.mxu0 0.0
      %599 = vmatprep.subr.mxu0 0.0
      %600 = vmatpush2.msra.mxu0 0.0
      %601 = vmatprep.subr.mxu0 0.0
      %602 = vmatpush2.msra.mxu0 0.0
      %603 = vmatprep.subr.mxu0 0.0
      %604 = vmatpush2.msra.mxu0 0.0
      %605 = vmatprep.subr.mxu0 0.0
      %606 = vmatpush2.msra.mxu0 0.0
      %607 = vmatprep.subr.mxu0 0.0
      %608 = vmatpush2.msra.mxu0 0.0
      %609 = vmatprep.subr.mxu0 0.0
      %610 = vmatpush2.msra.mxu0 0.0
      %611 = vmatprep.subr.mxu0 0.0
      %612 = vmatpush2.msra.mxu0 0.0
      %613 = vmatprep.subr.mxu0 0.0
      %614 = vmatpush2.msra.mxu0 0.0
      %615 = vmatprep.subr.mxu0 0.0
      %616 = vmatpush2.msra.mxu0 0.0
      %617 = vmatprep.mubr.f32.mxu0 0.0
      %618 = vmatmul.mubr.f32.gmra.mxu0 %v518
      %v619 = vpop.f32.mrf.mxu0
      %v620 = vadd.f32 0.0, %v619
      %v621 = vpop.f32.mrf.mxu0
      %622 = vmatprep.mubr.f32.mxu0 0.0
      %623 = vmatmul.mubr.f32.gmra.mxu0 %v521
      %v624 = vpop.f32.mrf.mxu0
      %v625 = vadd.f32 0.0, %v624
      %v626 = vpop.f32.mrf.mxu0
      %627 = vmatprep.mubr.f32.mxu0 0.0
      %628 = vmatmul.mubr.f32.gmra.mxu0 %v524
      %v629 = vpop.f32.mrf.mxu0
      %v630 = vadd.f32 0.0, %v629
      %v631 = vpop.f32.mrf.mxu0
      %632 = vmatprep.mubr.f32.mxu0 0.0
      %633 = vmatmul.mubr.f32.gmra.mxu0 %v527
      %v634 = vpop.f32.mrf.mxu0
      %v635 = vadd.f32 0.0, %v634
      %v636 = vpop.f32.mrf.mxu0
      %637 = vmatprep.mubr.f32.mxu0 0.0
      %638 = vmatmul.mubr.f32.gmra.mxu0 %v530
      %v639 = vpop.f32.mrf.mxu0
      %v640 = vadd.f32 0.0, %v639
      %v641 = vpop.f32.mrf.mxu0
      %642 = vmatprep.mubr.f32.mxu0 0.0
      %643 = vmatmul.mubr.f32.gmra.mxu0 %v533
      %v644 = vpop.f32.mrf.mxu0
      %v645 = vadd.f32 0.0, %v644
      %v646 = vpop.f32.mrf.mxu0
      %647 = vmatprep.mubr.f32.mxu0 0.0
      %648 = vmatmul.mubr.f32.gmra.mxu0 %v536
      %v649 = vpop.f32.mrf.mxu0
      %v650 = vadd.f32 0.0, %v649
      %v651 = vpop.f32.mrf.mxu0
      %652 = vmatprep.mubr.f32.mxu0 0.0
      %653 = vmatmul.mubr.f32.gmra.mxu0 %v539
      %v654 = vpop.f32.mrf.mxu0
      %v655 = vadd.f32 0.0, %v654
      %v656 = vpop.f32.mrf.mxu0
      %657 = vmatprep.mubr.f32.mxu0 0.0
      %658 = vmatmul.mubr.f32.gmra.mxu0 %v542
      %v659 = vpop.f32.mrf.mxu0
      %v660 = vadd.f32 0.0, %v659
      %v661 = vpop.f32.mrf.mxu0
      %662 = vmatprep.mubr.f32.mxu0 0.0
      %663 = vmatmul.mubr.f32.gmra.mxu0 %v545
      %v664 = vpop.f32.mrf.mxu0
      %v665 = vadd.f32 0.0, %v664
      %v666 = vpop.f32.mrf.mxu0
      %667 = vmatprep.mubr.f32.mxu0 0.0
      %668 = vmatmul.mubr.f32.gmra.mxu0 %v548
      %v669 = vpop.f32.mrf.mxu0
      %v670 = vadd.f32 0.0, %v669
      %v671 = vpop.f32.mrf.mxu0
      %672 = vmatprep.mubr.f32.mxu0 0.0
      %673 = vmatmul.mubr.f32.gmra.mxu0 %v551
      %v674 = vpop.f32.mrf.mxu0
      %v675 = vadd.f32 0.0, %v674
      %v676 = vpop.f32.mrf.mxu0
      %677 = vdwg.mxu0
      %v679 = vsel %vm516, %v273, 0
      %v682 = vsel %vm516, %v274, 0
      %v685 = vsel %vm516, %v275, 0
      %v688 = vsel %vm516, %v276, 0
      %v691 = vsel %vm516, %v277, 0
      %v694 = vsel %vm516, %v278, 0
      %v697 = vsel %vm516, %v279, 0
      %v700 = vsel %vm516, %v280, 0
      %v703 = vsel %vm516, %v281, 0
      %v706 = vsel %vm516, %v282, 0
      %v709 = vsel %vm516, %v283, 0
      %v712 = vsel %vm516, %v284, 0
      %714 = vmatprep.subr.mxu0 0.0
      %715 = vmatpush1.msra.mxu0 0.0
      %716 = vmatprep.subr.mxu0 0.0
      %717 = vmatpush1.msra.mxu0 0.0
      %718 = vmatprep.subr.mxu0 0.0
      %719 = vmatpush1.msra.mxu0 0.0
      %720 = vmatprep.subr.mxu0 0.0
      %721 = vmatpush1.msra.mxu0 0.0
      %722 = vmatprep.subr.mxu0 0.0
      %723 = vmatpush1.msra.mxu0 0.0
      %724 = vmatprep.subr.mxu0 0.0
      %725 = vmatpush1.msra.mxu0 0.0
      %726 = vmatprep.subr.mxu0 0.0
      %727 = vmatpush1.msra.mxu0 0.0
      %728 = vmatprep.subr.mxu0 0.0
      %729 = vmatpush1.msra.mxu0 0.0
      %730 = vmatprep.subr.mxu0 0.0
      %731 = vmatpush1.msra.mxu0 %v512
      %732 = vmatprep.subr.mxu0 0.0
      %733 = vmatpush1.msra.mxu0 %v506
      %734 = vmatprep.subr.mxu0 0.0
      %735 = vmatpush1.msra.mxu0 %v500
      %736 = vmatprep.subr.mxu0 0.0
      %737 = vmatpush1.msra.mxu0 %v494
      %738 = vmatprep.subr.mxu0 0.0
      %739 = vmatpush1.msra.mxu0 %v488
      %740 = vmatprep.subr.mxu0 0.0
      %741 = vmatpush1.msra.mxu0 %v482
      %742 = vmatprep.subr.mxu0 0.0
      %743 = vmatpush1.msra.mxu0 %v476
      %744 = vmatprep.subr.mxu0 0.0
      %745 = vmatpush1.msra.mxu0 %v470
      %746 = vmatprep.subr.mxu0 0.0
      %747 = vmatpush2.msra.mxu0 0.0
      %748 = vmatprep.subr.mxu0 0.0
      %749 = vmatpush2.msra.mxu0 0.0
      %750 = vmatprep.subr.mxu0 0.0
      %751 = vmatpush2.msra.mxu0 0.0
      %752 = vmatprep.subr.mxu0 0.0
      %753 = vmatpush2.msra.mxu0 0.0
      %754 = vmatprep.subr.mxu0 0.0
      %755 = vmatpush2.msra.mxu0 0.0
      %756 = vmatprep.subr.mxu0 0.0
      %757 = vmatpush2.msra.mxu0 0.0
      %758 = vmatprep.subr.mxu0 0.0
      %759 = vmatpush2.msra.mxu0 0.0
      %760 = vmatprep.subr.mxu0 0.0
      %761 = vmatpush2.msra.mxu0 0.0
      %762 = vmatprep.subr.mxu0 0.0
      %763 = vmatpush2.msra.mxu0 0.0
      %764 = vmatprep.subr.mxu0 0.0
      %765 = vmatpush2.msra.mxu0 0.0
      %766 = vmatprep.subr.mxu0 0.0
      %767 = vmatpush2.msra.mxu0 0.0
      %768 = vmatprep.subr.mxu0 0.0
      %769 = vmatpush2.msra.mxu0 0.0
      %770 = vmatprep.subr.mxu0 0.0
      %771 = vmatpush2.msra.mxu0 0.0
      %772 = vmatprep.subr.mxu0 0.0
      %773 = vmatpush2.msra.mxu0 0.0
      %774 = vmatprep.subr.mxu0 0.0
      %775 = vmatpush2.msra.mxu0 0.0
      %776 = vmatprep.subr.mxu0 0.0
      %777 = vmatpush2.msra.mxu0 0.0
      %778 = vmatprep.mubr.f32.mxu0 0.0
      %779 = vmatmul.mubr.f32.gmra.mxu0 %v679
      %v780 = vpop.f32.mrf.mxu0
      %v781 = vadd.f32 0.0, %v780
      %v782 = vpop.f32.mrf.mxu0
      %783 = vmatprep.mubr.f32.mxu0 0.0
      %784 = vmatmul.mubr.f32.gmra.mxu0 %v682
      %v785 = vpop.f32.mrf.mxu0
      %v786 = vadd.f32 0.0, %v785
      %v787 = vpop.f32.mrf.mxu0
      %788 = vmatprep.mubr.f32.mxu0 0.0
      %789 = vmatmul.mubr.f32.gmra.mxu0 %v685
      %v790 = vpop.f32.mrf.mxu0
      %v791 = vadd.f32 0.0, %v790
      %v792 = vpop.f32.mrf.mxu0
      %793 = vmatprep.mubr.f32.mxu0 0.0
      %794 = vmatmul.mubr.f32.gmra.mxu0 %v688
      %v795 = vpop.f32.mrf.mxu0
      %v796 = vadd.f32 0.0, %v795
      %v797 = vpop.f32.mrf.mxu0
      %798 = vmatprep.mubr.f32.mxu0 0.0
      %799 = vmatmul.mubr.f32.gmra.mxu0 %v691
      %v800 = vpop.f32.mrf.mxu0
      %v801 = vadd.f32 0.0, %v800
      %v802 = vpop.f32.mrf.mxu0
      %803 = vmatprep.mubr.f32.mxu0 0.0
      %804 = vmatmul.mubr.f32.gmra.mxu0 %v694
      %v805 = vpop.f32.mrf.mxu0
      %v806 = vadd.f32 0.0, %v805
      %v807 = vpop.f32.mrf.mxu0
      %808 = vmatprep.mubr.f32.mxu0 0.0
      %809 = vmatmul.mubr.f32.gmra.mxu0 %v697
      %v810 = vpop.f32.mrf.mxu0
      %v811 = vadd.f32 0.0, %v810
      %v812 = vpop.f32.mrf.mxu0
      %813 = vmatprep.mubr.f32.mxu0 0.0
      %814 = vmatmul.mubr.f32.gmra.mxu0 %v700
      %v815 = vpop.f32.mrf.mxu0
      %v816 = vadd.f32 0.0, %v815
      %v817 = vpop.f32.mrf.mxu0
      %818 = vmatprep.mubr.f32.mxu0 0.0
      %819 = vmatmul.mubr.f32.gmra.mxu0 %v703
      %v820 = vpop.f32.mrf.mxu0
      %v821 = vadd.f32 0.0, %v820
      %v822 = vpop.f32.mrf.mxu0
      %823 = vmatprep.mubr.f32.mxu0 0.0
      %824 = vmatmul.mubr.f32.gmra.mxu0 %v706
      %v825 = vpop.f32.mrf.mxu0
      %v826 = vadd.f32 0.0, %v825
      %v827 = vpop.f32.mrf.mxu0
      %828 = vmatprep.mubr.f32.mxu0 0.0
      %829 = vmatmul.mubr.f32.gmra.mxu0 %v709
      %v830 = vpop.f32.mrf.mxu0
      %v831 = vadd.f32 0.0, %v830
      %v832 = vpop.f32.mrf.mxu0
      %833 = vmatprep.mubr.f32.mxu0 0.0
      %834 = vmatmul.mubr.f32.gmra.mxu0 %v712
      %v835 = vpop.f32.mrf.mxu0
      %v836 = vadd.f32 0.0, %v835
      %v837 = vpop.f32.mrf.mxu0
      %838 = vdwg.mxu0
      %v839 = vld [vmem:[%s2 + $0x1f0] sm:$0xff]
      %v840 = vld [vmem:[%s2 + $0x200] sm:$0xff]
      %v841 = vld [vmem:[%s2 + $0x210] sm:$0xff]
      %v842 = vld [vmem:[%s2 + $0x220] sm:$0xff]
      %v843 = vld [vmem:[%s2 + $0x230] sm:$0xff]
      %v844 = vld [vmem:[%s2 + $0x240] sm:$0xff]
      %v845 = vld [vmem:[%s2 + $0x250] sm:$0xff]
      %v846 = vld [vmem:[%s2 + $0x260] sm:$0xff]
      %v847 = vld [vmem:[%s2 + $0x270] sm:$0xff]
      %v848 = vld [vmem:[%s2 + $0x280] sm:$0xff]
      %v849 = vld [vmem:[%s2 + $0x290] sm:$0xff]
      %v850 = vld [vmem:[%s2 + $0x2a0] sm:$0xff]
      %v851 = vld [vmem:[%s2 + $0x2b0] sm:$0xff]
      %v852 = vld [vmem:[%s2 + $0x2c0] sm:$0xff]
      %v853 = vld [vmem:[%s2 + $0x2d0] sm:$0xff]
      %v854 = vld [vmem:[%s2 + $0x2e0] sm:$0xff]
      %v855 = vld [vmem:[%s2 + $0x2f0] sm:$0xff]
      %v856 = vld [vmem:[%s2 + $0x300] sm:$0xff]
      %v857 = vld [vmem:[%s2 + $0x310] sm:$0xff]
      %v858 = vld [vmem:[%s2 + $0x320] sm:$0xff]
      %v859 = vld [vmem:[%s2 + $0x330] sm:$0xff]
      %v860 = vld [vmem:[%s2 + $0x340] sm:$0xff]
      %v861 = vld [vmem:[%s2 + $0x350] sm:$0xff]
      %v862 = vld [vmem:[%s2 + $0x360] sm:$0xff]
      %v863 = vld [vmem:[%s2 + $0xa0] sm:$0xff]
      %v864 = vld [vmem:[%s2 + $0xb0] sm:$0xff]
      %v865 = vld [vmem:[%s2 + $0xc0] sm:$0xff]
      %v866 = vld [vmem:[%s2 + $0xd0] sm:$0xff]
      %v867 = vld [vmem:[%s2 + $0xe0] sm:$0xff]
      %v868 = vld [vmem:[%s2 + $0xf0] sm:$0xff]
      %v869 = vld [vmem:[%s2 + $0x100] sm:$0xff]
      %v870 = vld [vmem:[%s2 + $0x110] sm:$0xff]
      %v871 = vld [vmem:[%s2 + $0x120] sm:$0xff]
      %v872 = vld [vmem:[%s2 + $0x130] sm:$0xff]
      %v873 = vld [vmem:[%s2 + $0x140] sm:$0xff]
      %v874 = vld [vmem:[%s2 + $0x150] sm:$0xff]
      %v875 = vld [vmem:[%s2 + $0x160] sm:$0xff]
      %v876 = vld [vmem:[%s2 + $0x170] sm:$0xff]
      %v877 = vld [vmem:[%s2 + $0x180] sm:$0xff]
      %v878 = vld [vmem:[%s2 + $0x190] sm:$0xff]
      %v879 = vmul.f32 %v781, %v839
      %v880 = vmul.f32 %v786, %v840
      %v881 = vmul.f32 %v791, %v841
      %v882 = vmul.f32 %v796, %v842
      %v883 = vmul.f32 %v801, %v843
      %v884 = vmul.f32 %v806, %v844
      %v885 = vmul.f32 %v811, %v845
      %v886 = vmul.f32 %v816, %v846
      %v887 = vmul.f32 %v821, %v847
      %v888 = vmul.f32 %v826, %v848
      %v889 = vmul.f32 %v831, %v849
      %v890 = vmul.f32 %v836, %v850
      %891 = vmatprep.subr.mxu0 0.0
      %892 = vmatpush1.msra.mxu0 %v878
      %893 = vmatprep.subr.mxu0 0.0
      %894 = vmatpush1.msra.mxu0 %v877
      %895 = vmatprep.subr.mxu0 0.0
      %896 = vmatpush1.msra.mxu0 %v876
      %897 = vmatprep.subr.mxu0 0.0
      %898 = vmatpush1.msra.mxu0 %v875
      %899 = vmatprep.subr.mxu0 0.0
      %900 = vmatpush1.msra.mxu0 %v874
      %901 = vmatprep.subr.mxu0 0.0
      %902 = vmatpush1.msra.mxu0 %v873
      %903 = vmatprep.subr.mxu0 0.0
      %904 = vmatpush1.msra.mxu0 %v872
      %905 = vmatprep.subr.mxu0 0.0
      %906 = vmatpush1.msra.mxu0 %v871
      %907 = vmatprep.subr.mxu0 0.0
      %908 = vmatpush1.msra.mxu0 %v870
      %909 = vmatprep.subr.mxu0 0.0
      %910 = vmatpush1.msra.mxu0 %v869
      %911 = vmatprep.subr.mxu0 0.0
      %912 = vmatpush1.msra.mxu0 %v868
      %913 = vmatprep.subr.mxu0 0.0
      %914 = vmatpush1.msra.mxu0 %v867
      %915 = vmatprep.subr.mxu0 0.0
      %916 = vmatpush1.msra.mxu0 %v866
      %917 = vmatprep.subr.mxu0 0.0
      %918 = vmatpush1.msra.mxu0 %v865
      %919 = vmatprep.subr.mxu0 0.0
      %920 = vmatpush1.msra.mxu0 %v864
      %921 = vmatprep.subr.mxu0 0.0
      %922 = vmatpush1.msra.mxu0 %v863
      %923 = vmatprep.subr.mxu0 0.0
      %924 = vmatpush2.msra.mxu0 0.0
      %925 = vmatprep.subr.mxu0 0.0
      %926 = vmatpush2.msra.mxu0 0.0
      %927 = vmatprep.subr.mxu0 0.0
      %928 = vmatpush2.msra.mxu0 0.0
      %929 = vmatprep.subr.mxu0 0.0
      %930 = vmatpush2.msra.mxu0 0.0
      %931 = vmatprep.subr.mxu0 0.0
      %932 = vmatpush2.msra.mxu0 0.0
      %933 = vmatprep.subr.mxu0 0.0
      %934 = vmatpush2.msra.mxu0 0.0
      %935 = vmatprep.subr.mxu0 0.0
      %936 = vmatpush2.msra.mxu0 0.0
      %937 = vmatprep.subr.mxu0 0.0
      %938 = vmatpush2.msra.mxu0 0.0
      %939 = vmatprep.subr.mxu0 0.0
      %940 = vmatpush2.msra.mxu0 0.0
      %941 = vmatprep.subr.mxu0 0.0
      %942 = vmatpush2.msra.mxu0 0.0
      %943 = vmatprep.subr.mxu0 0.0
      %944 = vmatpush2.msra.mxu0 0.0
      %945 = vmatprep.subr.mxu0 0.0
      %946 = vmatpush2.msra.mxu0 0.0
      %947 = vmatprep.subr.mxu0 0.0
      %948 = vmatpush2.msra.mxu0 0.0
      %949 = vmatprep.subr.mxu0 0.0
      %950 = vmatpush2.msra.mxu0 0.0
      %951 = vmatprep.subr.mxu0 0.0
      %952 = vmatpush2.msra.mxu0 0.0
      %953 = vmatprep.subr.mxu0 0.0
      %954 = vmatpush2.msra.mxu0 0.0
      %955 = vmatprep.mubr.f32.mxu0 0.0
      %956 = vmatmul.mubr.f32.gmra.mxu0 %v879
      %v957 = vpop.f32.mrf.mxu0
      %v958 = vadd.f32 0.0, %v957
      %v959 = vpop.f32.mrf.mxu0
      %960 = vmatprep.mubr.f32.mxu0 0.0
      %961 = vmatmul.mubr.f32.gmra.mxu0 %v880
      %v962 = vpop.f32.mrf.mxu0
      %v963 = vadd.f32 0.0, %v962
      %v964 = vpop.f32.mrf.mxu0
      %965 = vmatprep.mubr.f32.mxu0 0.0
      %966 = vmatmul.mubr.f32.gmra.mxu0 %v881
      %v967 = vpop.f32.mrf.mxu0
      %v968 = vadd.f32 0.0, %v967
      %v969 = vpop.f32.mrf.mxu0
      %970 = vmatprep.mubr.f32.mxu0 0.0
      %971 = vmatmul.mubr.f32.gmra.mxu0 %v882
      %v972 = vpop.f32.mrf.mxu0
      %v973 = vadd.f32 0.0, %v972
      %v974 = vpop.f32.mrf.mxu0
      %975 = vmatprep.mubr.f32.mxu0 0.0
      %976 = vmatmul.mubr.f32.gmra.mxu0 %v883
      %v977 = vpop.f32.mrf.mxu0
      %v978 = vadd.f32 0.0, %v977
      %v979 = vpop.f32.mrf.mxu0
      %980 = vmatprep.mubr.f32.mxu0 0.0
      %981 = vmatmul.mubr.f32.gmra.mxu0 %v884
      %v982 = vpop.f32.mrf.mxu0
      %v983 = vadd.f32 0.0, %v982
      %v984 = vpop.f32.mrf.mxu0
      %985 = vmatprep.mubr.f32.mxu0 0.0
      %986 = vmatmul.mubr.f32.gmra.mxu0 %v885
      %v987 = vpop.f32.mrf.mxu0
      %v988 = vadd.f32 0.0, %v987
      %v989 = vpop.f32.mrf.mxu0
      %990 = vmatprep.mubr.f32.mxu0 0.0
      %991 = vmatmul.mubr.f32.gmra.mxu0 %v886
      %v992 = vpop.f32.mrf.mxu0
      %v993 = vadd.f32 0.0, %v992
      %v994 = vpop.f32.mrf.mxu0
      %995 = vmatprep.mubr.f32.mxu0 0.0
      %996 = vmatmul.mubr.f32.gmra.mxu0 %v887
      %v997 = vpop.f32.mrf.mxu0
      %v998 = vadd.f32 0.0, %v997
      %v999 = vpop.f32.mrf.mxu0
      %1000 = vmatprep.mubr.f32.mxu0 0.0
      %1001 = vmatmul.mubr.f32.gmra.mxu0 %v888
      %v1002 = vpop.f32.mrf.mxu0
      %v1003 = vadd.f32 0.0, %v1002
      %v1004 = vpop.f32.mrf.mxu0
      %1005 = vmatprep.mubr.f32.mxu0 0.0
      %1006 = vmatmul.mubr.f32.gmra.mxu0 %v889
      %v1007 = vpop.f32.mrf.mxu0
      %v1008 = vadd.f32 0.0, %v1007
      %v1009 = vpop.f32.mrf.mxu0
      %1010 = vmatprep.mubr.f32.mxu0 0.0
      %1011 = vmatmul.mubr.f32.gmra.mxu0 %v890
      %v1012 = vpop.f32.mrf.mxu0
      %v1013 = vadd.f32 0.0, %v1012
      %v1014 = vpop.f32.mrf.mxu0
      %1015 = vdwg.mxu0
      %v1016 = vmul.f32 %v781, %v851
      %v1017 = vmul.f32 %v786, %v852
      %v1018 = vmul.f32 %v791, %v853
      %v1019 = vmul.f32 %v796, %v854
      %v1020 = vmul.f32 %v801, %v855
      %v1021 = vmul.f32 %v806, %v856
      %v1022 = vmul.f32 %v811, %v857
      %v1023 = vmul.f32 %v816, %v858
      %v1024 = vmul.f32 %v821, %v859
      %v1025 = vmul.f32 %v826, %v860
      %v1026 = vmul.f32 %v831, %v861
      %v1027 = vmul.f32 %v836, %v862
      %1028 = vmatprep.subr.mxu0 0.0
      %1029 = vmatpush1.msra.mxu0 %v878
      %1030 = vmatprep.subr.mxu0 0.0
      %1031 = vmatpush1.msra.mxu0 %v877
      %1032 = vmatprep.subr.mxu0 0.0
      %1033 = vmatpush1.msra.mxu0 %v876
      %1034 = vmatprep.subr.mxu0 0.0
      %1035 = vmatpush1.msra.mxu0 %v875
      %1036 = vmatprep.subr.mxu0 0.0
      %1037 = vmatpush1.msra.mxu0 %v874
      %1038 = vmatprep.subr.mxu0 0.0
      %1039 = vmatpush1.msra.mxu0 %v873
      %1040 = vmatprep.subr.mxu0 0.0
      %1041 = vmatpush1.msra.mxu0 %v872
      %1042 = vmatprep.subr.mxu0 0.0
      %1043 = vmatpush1.msra.mxu0 %v871
      %1044 = vmatprep.subr.mxu0 0.0
      %1045 = vmatpush1.msra.mxu0 %v870
      %1046 = vmatprep.subr.mxu0 0.0
      %1047 = vmatpush1.msra.mxu0 %v869
      %1048 = vmatprep.subr.mxu0 0.0
      %1049 = vmatpush1.msra.mxu0 %v868
      %1050 = vmatprep.subr.mxu0 0.0
      %1051 = vmatpush1.msra.mxu0 %v867
      %1052 = vmatprep.subr.mxu0 0.0
      %1053 = vmatpush1.msra.mxu0 %v866
      %1054 = vmatprep.subr.mxu0 0.0
      %1055 = vmatpush1.msra.mxu0 %v865
      %1056 = vmatprep.subr.mxu0 0.0
      %1057 = vmatpush1.msra.mxu0 %v864
      %1058 = vmatprep.subr.mxu0 0.0
      %1059 = vmatpush1.msra.mxu0 %v863
      %1060 = vmatprep.subr.mxu0 0.0
      %1061 = vmatpush2.msra.mxu0 0.0
      %1062 = vmatprep.subr.mxu0 0.0
      %1063 = vmatpush2.msra.mxu0 0.0
      %1064 = vmatprep.subr.mxu0 0.0
      %1065 = vmatpush2.msra.mxu0 0.0
      %1066 = vmatprep.subr.mxu0 0.0
      %1067 = vmatpush2.msra.mxu0 0.0
      %1068 = vmatprep.subr.mxu0 0.0
      %1069 = vmatpush2.msra.mxu0 0.0
      %1070 = vmatprep.subr.mxu0 0.0
      %1071 = vmatpush2.msra.mxu0 0.0
      %1072 = vmatprep.subr.mxu0 0.0
      %1073 = vmatpush2.msra.mxu0 0.0
      %1074 = vmatprep.subr.mxu0 0.0
      %1075 = vmatpush2.msra.mxu0 0.0
      %1076 = vmatprep.subr.mxu0 0.0
      %1077 = vmatpush2.msra.mxu0 0.0
      %1078 = vmatprep.subr.mxu0 0.0
      %1079 = vmatpush2.msra.mxu0 0.0
      %1080 = vmatprep.subr.mxu0 0.0
      %1081 = vmatpush2.msra.mxu0 0.0
      %1082 = vmatprep.subr.mxu0 0.0
      %1083 = vmatpush2.msra.mxu0 0.0
      %1084 = vmatprep.subr.mxu0 0.0
      %1085 = vmatpush2.msra.mxu0 0.0
      %1086 = vmatprep.subr.mxu0 0.0
      %1087 = vmatpush2.msra.mxu0 0.0
      %1088 = vmatprep.subr.mxu0 0.0
      %1089 = vmatpush2.msra.mxu0 0.0
      %1090 = vmatprep.subr.mxu0 0.0
      %1091 = vmatpush2.msra.mxu0 0.0
      %1092 = vmatprep.mubr.f32.mxu0 0.0
      %1093 = vmatmul.mubr.f32.gmra.mxu0 %v1016
      %v1094 = vpop.f32.mrf.mxu0
      %v1095 = vadd.f32 0.0, %v1094
      %v1096 = vpop.f32.mrf.mxu0
      %1097 = vmatprep.mubr.f32.mxu0 0.0
      %1098 = vmatmul.mubr.f32.gmra.mxu0 %v1017
      %v1099 = vpop.f32.mrf.mxu0
      %v1100 = vadd.f32 0.0, %v1099
      %v1101 = vpop.f32.mrf.mxu0
      %1102 = vmatprep.mubr.f32.mxu0 0.0
      %1103 = vmatmul.mubr.f32.gmra.mxu0 %v1018
      %v1104 = vpop.f32.mrf.mxu0
      %v1105 = vadd.f32 0.0, %v1104
      %v1106 = vpop.f32.mrf.mxu0
      %1107 = vmatprep.mubr.f32.mxu0 0.0
      %1108 = vmatmul.mubr.f32.gmra.mxu0 %v1019
      %v1109 = vpop.f32.mrf.mxu0
      %v1110 = vadd.f32 0.0, %v1109
      %v1111 = vpop.f32.mrf.mxu0
      %1112 = vmatprep.mubr.f32.mxu0 0.0
      %1113 = vmatmul.mubr.f32.gmra.mxu0 %v1020
      %v1114 = vpop.f32.mrf.mxu0
      %v1115 = vadd.f32 0.0, %v1114
      %v1116 = vpop.f32.mrf.mxu0
      %1117 = vmatprep.mubr.f32.mxu0 0.0
      %1118 = vmatmul.mubr.f32.gmra.mxu0 %v1021
      %v1119 = vpop.f32.mrf.mxu0
      %v1120 = vadd.f32 0.0, %v1119
      %v1121 = vpop.f32.mrf.mxu0
      %1122 = vmatprep.mubr.f32.mxu0 0.0
      %1123 = vmatmul.mubr.f32.gmra.mxu0 %v1022
      %v1124 = vpop.f32.mrf.mxu0
      %v1125 = vadd.f32 0.0, %v1124
      %v1126 = vpop.f32.mrf.mxu0
      %1127 = vmatprep.mubr.f32.mxu0 0.0
      %1128 = vmatmul.mubr.f32.gmra.mxu0 %v1023
      %v1129 = vpop.f32.mrf.mxu0
      %v1130 = vadd.f32 0.0, %v1129
      %v1131 = vpop.f32.mrf.mxu0
      %1132 = vmatprep.mubr.f32.mxu0 0.0
      %1133 = vmatmul.mubr.f32.gmra.mxu0 %v1024
      %v1134 = vpop.f32.mrf.mxu0
      %v1135 = vadd.f32 0.0, %v1134
      %v1136 = vpop.f32.mrf.mxu0
      %1137 = vmatprep.mubr.f32.mxu0 0.0
      %1138 = vmatmul.mubr.f32.gmra.mxu0 %v1025
      %v1139 = vpop.f32.mrf.mxu0
      %v1140 = vadd.f32 0.0, %v1139
      %v1141 = vpop.f32.mrf.mxu0
      %1142 = vmatprep.mubr.f32.mxu0 0.0
      %1143 = vmatmul.mubr.f32.gmra.mxu0 %v1026
      %v1144 = vpop.f32.mrf.mxu0
      %v1145 = vadd.f32 0.0, %v1144
      %v1146 = vpop.f32.mrf.mxu0
      %1147 = vmatprep.mubr.f32.mxu0 0.0
      %1148 = vmatmul.mubr.f32.gmra.mxu0 %v1027
      %v1149 = vpop.f32.mrf.mxu0
      %v1150 = vadd.f32 0.0, %v1149
      %v1151 = vpop.f32.mrf.mxu0
      %1152 = vdwg.mxu0
      %v1153 = vld [vmem:[%s2 + $0x1a0] sm:$0xff]
      %v1154 = vld [vmem:[%s2 + $0x1b0] sm:$0xff]
      %v1155 = vld [vmem:[%s2 + $0x1c0] sm:$0xff]
      %v1156 = vld [vmem:[%s2 + $0x1d0] sm:$0xff]
      %v1157 = vmul.f32 %v620, %v958
      %v1158 = vmul.f32 %v625, %v963
      %v1159 = vmul.f32 %v630, %v968
      %v1160 = vmul.f32 %v635, %v973
      %v1161 = vmul.f32 %v640, %v978
      %v1162 = vmul.f32 %v645, %v983
      %v1163 = vmul.f32 %v650, %v988
      %v1164 = vmul.f32 %v655, %v993
      %v1165 = vmul.f32 %v660, %v998
      %v1166 = vmul.f32 %v665, %v1003
      %v1167 = vmul.f32 %v670, %v1008
      %v1168 = vmul.f32 %v675, %v1013
      %v1170 = vsel %vm378, %v1157, 0
      %v1173 = vsel %vm378, %v1158, 0
      %v1176 = vsel %vm378, %v1159, 0
      %v1179 = vsel %vm378, %v1160, 0
      %v1182 = vsel %vm378, %v1161, 0
      %v1185 = vsel %vm378, %v1162, 0
      %v1188 = vsel %vm378, %v1163, 0
      %v1191 = vsel %vm378, %v1164, 0
      %v1194 = vsel %vm378, %v1165, 0
      %v1197 = vsel %vm378, %v1166, 0
      %v1200 = vsel %vm378, %v1167, 0
      %v1203 = vsel %vm378, %v1168, 0
      %1205 = vmatprep.subr.mxu0 0.0
      %1206 = vmatpush1.msra.mxu0 0.0
      %1207 = vmatprep.subr.mxu0 0.0
      %1208 = vmatpush1.msra.mxu0 0.0
      %1209 = vmatprep.subr.mxu0 0.0
      %1210 = vmatpush1.msra.mxu0 0.0
      %1211 = vmatprep.subr.mxu0 0.0
      %1212 = vmatpush1.msra.mxu0 0.0
      %1213 = vmatprep.subr.mxu0 0.0
      %1214 = vmatpush1.msra.mxu0 0.0
      %1215 = vmatprep.subr.mxu0 0.0
      %1216 = vmatpush1.msra.mxu0 0.0
      %1217 = vmatprep.subr.mxu0 0.0
      %1218 = vmatpush1.msra.mxu0 0.0
      %1219 = vmatprep.subr.mxu0 0.0
      %1220 = vmatpush1.msra.mxu0 0.0
      %1221 = vmatprep.subr.mxu0 0.0
      %1222 = vmatpush1.msra.mxu0 0.0
      %1223 = vmatprep.subr.mxu0 0.0
      %1224 = vmatpush1.msra.mxu0 0.0
      %1225 = vmatprep.subr.mxu0 0.0
      %1226 = vmatpush1.msra.mxu0 0.0
      %1227 = vmatprep.subr.mxu0 0.0
      %1228 = vmatpush1.msra.mxu0 0.0
      %1229 = vmatprep.subr.mxu0 0.0
      %1230 = vmatpush1.msra.mxu0 %v1156
      %1231 = vmatprep.subr.mxu0 0.0
      %1232 = vmatpush1.msra.mxu0 %v1155
      %1233 = vmatprep.subr.mxu0 0.0
      %1234 = vmatpush1.msra.mxu0 %v1154
      %1235 = vmatprep.subr.mxu0 0.0
      %1236 = vmatpush1.msra.mxu0 %v1153
      %1237 = vmatprep.subr.mxu0 0.0
      %1238 = vmatpush2.msra.mxu0 0.0
      %1239 = vmatprep.subr.mxu0 0.0
      %1240 = vmatpush2.msra.mxu0 0.0
      %1241 = vmatprep.subr.mxu0 0.0
      %1242 = vmatpush2.msra.mxu0 0.0
      %1243 = vmatprep.subr.mxu0 0.0
      %1244 = vmatpush2.msra.mxu0 0.0
      %1245 = vmatprep.subr.mxu0 0.0
      %1246 = vmatpush2.msra.mxu0 0.0
      %1247 = vmatprep.subr.mxu0 0.0
      %1248 = vmatpush2.msra.mxu0 0.0
      %1249 = vmatprep.subr.mxu0 0.0
      %1250 = vmatpush2.msra.mxu0 0.0
      %1251 = vmatprep.subr.mxu0 0.0
      %1252 = vmatpush2.msra.mxu0 0.0
      %1253 = vmatprep.subr.mxu0 0.0
      %1254 = vmatpush2.msra.mxu0 0.0
      %1255 = vmatprep.subr.mxu0 0.0
      %1256 = vmatpush2.msra.mxu0 0.0
      %1257 = vmatprep.subr.mxu0 0.0
      %1258 = vmatpush2.msra.mxu0 0.0
      %1259 = vmatprep.subr.mxu0 0.0
      %1260 = vmatpush2.msra.mxu0 0.0
      %1261 = vmatprep.subr.mxu0 0.0
      %1262 = vmatpush2.msra.mxu0 0.0
      %1263 = vmatprep.subr.mxu0 0.0
      %1264 = vmatpush2.msra.mxu0 0.0
      %1265 = vmatprep.subr.mxu0 0.0
      %1266 = vmatpush2.msra.mxu0 0.0
      %1267 = vmatprep.subr.mxu0 0.0
      %1268 = vmatpush2.msra.mxu0 0.0
      %1269 = vmatprep.mubr.f32.mxu0 0.0
      %1270 = vmatmul.mubr.f32.gmra.mxu0 %v1170
      %v1271 = vpop.f32.mrf.mxu0
      %v1272 = vadd.f32 0.0, %v1271
      %v1273 = vpop.f32.mrf.mxu0
      %1274 = vmatprep.mubr.f32.mxu0 0.0
      %1275 = vmatmul.mubr.f32.gmra.mxu0 %v1173
      %v1276 = vpop.f32.mrf.mxu0
      %v1277 = vadd.f32 0.0, %v1276
      %v1278 = vpop.f32.mrf.mxu0
      %1279 = vmatprep.mubr.f32.mxu0 0.0
      %1280 = vmatmul.mubr.f32.gmra.mxu0 %v1176
      %v1281 = vpop.f32.mrf.mxu0
      %v1282 = vadd.f32 0.0, %v1281
      %v1283 = vpop.f32.mrf.mxu0
      %1284 = vmatprep.mubr.f32.mxu0 0.0
      %1285 = vmatmul.mubr.f32.gmra.mxu0 %v1179
      %v1286 = vpop.f32.mrf.mxu0
      %v1287 = vadd.f32 0.0, %v1286
      %v1288 = vpop.f32.mrf.mxu0
      %1289 = vmatprep.mubr.f32.mxu0 0.0
      %1290 = vmatmul.mubr.f32.gmra.mxu0 %v1182
      %v1291 = vpop.f32.mrf.mxu0
      %v1292 = vadd.f32 0.0, %v1291
      %v1293 = vpop.f32.mrf.mxu0
      %1294 = vmatprep.mubr.f32.mxu0 0.0
      %1295 = vmatmul.mubr.f32.gmra.mxu0 %v1185
      %v1296 = vpop.f32.mrf.mxu0
      %v1297 = vadd.f32 0.0, %v1296
      %v1298 = vpop.f32.mrf.mxu0
      %1299 = vmatprep.mubr.f32.mxu0 0.0
      %1300 = vmatmul.mubr.f32.gmra.mxu0 %v1188
      %v1301 = vpop.f32.mrf.mxu0
      %v1302 = vadd.f32 0.0, %v1301
      %v1303 = vpop.f32.mrf.mxu0
      %1304 = vmatprep.mubr.f32.mxu0 0.0
      %1305 = vmatmul.mubr.f32.gmra.mxu0 %v1191
      %v1306 = vpop.f32.mrf.mxu0
      %v1307 = vadd.f32 0.0, %v1306
      %v1308 = vpop.f32.mrf.mxu0
      %1309 = vmatprep.mubr.f32.mxu0 0.0
      %1310 = vmatmul.mubr.f32.gmra.mxu0 %v1194
      %v1311 = vpop.f32.mrf.mxu0
      %v1312 = vadd.f32 0.0, %v1311
      %v1313 = vpop.f32.mrf.mxu0
      %1314 = vmatprep.mubr.f32.mxu0 0.0
      %1315 = vmatmul.mubr.f32.gmra.mxu0 %v1197
      %v1316 = vpop.f32.mrf.mxu0
      %v1317 = vadd.f32 0.0, %v1316
      %v1318 = vpop.f32.mrf.mxu0
      %1319 = vmatprep.mubr.f32.mxu0 0.0
      %1320 = vmatmul.mubr.f32.gmra.mxu0 %v1200
      %v1321 = vpop.f32.mrf.mxu0
      %v1322 = vadd.f32 0.0, %v1321
      %v1323 = vpop.f32.mrf.mxu0
      %1324 = vmatprep.mubr.f32.mxu0 0.0
      %1325 = vmatmul.mubr.f32.gmra.mxu0 %v1203
      %v1326 = vpop.f32.mrf.mxu0
      %v1327 = vadd.f32 0.0, %v1326
      %v1328 = vpop.f32.mrf.mxu0
      %1329 = vdwg.mxu0
      %vm1330 = vcmask 31744
      %v1331 = vsel %vm1330, %v1272, -inf
      %v1332 = vsel %vm1330, %v1277, -inf
      %v1333 = vsel %vm1330, %v1282, -inf
      %v1334 = vsel %vm1330, %v1287, -inf
      %v1335 = vsel %vm1330, %v1292, -inf
      %v1336 = vmax.f32 %v1331, %v1335
      %v1337 = vsel %vm1330, %v1297, -inf
      %v1338 = vmax.f32 %v1332, %v1337
      %v1339 = vsel %vm1330, %v1302, -inf
      %v1340 = vmax.f32 %v1333, %v1339
      %v1341 = vsel %vm1330, %v1307, -inf
      %v1342 = vmax.f32 %v1334, %v1341
      %v1343 = vsel %vm1330, %v1312, -inf
      %v1344 = vmax.f32 %v1336, %v1343
      %v1345 = vsel %vm1330, %v1317, -inf
      %v1346 = vmax.f32 %v1338, %v1345
      %v1347 = vsel %vm1330, %v1322, -inf
      %v1348 = vmax.f32 %v1340, %v1347
      %v1349 = vsel %vm1330, %v1327, -inf
      %v1350 = vmax.f32 %v1342, %v1349
      %v1351 = vmax.f32 %v1344, %v1346
      %v1352 = vmax.f32 %v1348, %v1350
      %v1353 = vmax.f32 %v1351, %v1352
      %v1354 = vrot.slane %v1353, 4
      %v1355 = vmax.f32 %v1353, %v1354
      %v1356 = vrot.slane %v1355, 2
      %v1357 = vmax.f32 %v1355, %v1356
      %v1358 = vrot.slane %v1357, 1
      %v1359 = vmax.f32 %v1357, %v1358
      %v1360 = vsub.f32 %v1272, %v1359
      %v1361 = vsub.f32 %v1277, %v1359
      %v1362 = vsub.f32 %v1282, %v1359
      %v1363 = vsub.f32 %v1287, %v1359
      %v1364 = vsub.f32 %v1292, %v1359
      %v1365 = vsub.f32 %v1297, %v1359
      %v1366 = vsub.f32 %v1302, %v1359
      %v1367 = vsub.f32 %v1307, %v1359
      %v1368 = vsub.f32 %v1312, %v1359
      %v1369 = vsub.f32 %v1317, %v1359
      %v1370 = vsub.f32 %v1322, %v1359
      %v1371 = vsub.f32 %v1327, %v1359
      %v1372 = vmul.f32 %v1360, 1.442695
      %v1373 = vpow.pop %v1372
      %v1374 = vmul.f32 %v1361, 1.442695
      %v1375 = vpow.pop %v1374
      %v1376 = vmul.f32 %v1362, 1.442695
      %v1377 = vpow.pop %v1376
      %v1378 = vmul.f32 %v1363, 1.442695
      %v1379 = vpow.pop %v1378
      %v1380 = vmul.f32 %v1364, 1.442695
      %v1381 = vpow.pop %v1380
      %v1382 = vmul.f32 %v1365, 1.442695
      %v1383 = vpow.pop %v1382
      %v1384 = vmul.f32 %v1366, 1.442695
      %v1385 = vpow.pop %v1384
      %v1386 = vmul.f32 %v1367, 1.442695
      %v1387 = vpow.pop %v1386
      %v1388 = vmul.f32 %v1368, 1.442695
      %v1389 = vpow.pop %v1388
      %v1390 = vmul.f32 %v1369, 1.442695
      %v1391 = vpow.pop %v1390
      %v1392 = vmul.f32 %v1370, 1.442695
      %v1393 = vpow.pop %v1392
      %v1394 = vmul.f32 %v1371, 1.442695
      %v1395 = vpow.pop %v1394
      %1396 = vxpose.xlu0.b32.start [1/16] %v345, 128
      %1397 = vxpose.xlu0.b32.cont [2/16] %v346, 128
      %1398 = vxpose.xlu0.b32.cont [3/16] %v347, 128
      %1399 = vxpose.xlu0.b32.cont [4/16] %v348, 128
      %1400 = vxpose.xlu0.b32.cont [5/16] %v349, 128
      %1401 = vxpose.xlu0.b32.cont [6/16] %v350, 128
      %1402 = vxpose.xlu0.b32.cont [7/16] %v351, 128
      %1403 = vxpose.xlu0.b32.cont [8/16] %v352, 128
      %1404 = vxpose.xlu0.b32.cont [9/16] %v353, 128
      %1405 = vxpose.xlu0.b32.cont [10/16] %v354, 128
      %1406 = vxpose.xlu0.b32.cont [11/16] %v355, 128
      %1407 = vxpose.xlu0.b32.cont [12/16] %v356, 128
      %1408 = vxpose.xlu0.b32.cont [13/16] 0.0, 128
      %1409 = vxpose.xlu0.b32.cont [14/16] 0.0, 128
      %1410 = vxpose.xlu0.b32.cont [15/16] 0.0, 128
      %1411 = vxpose.xlu0.b32.end [16/16] 0.0, 128
      %v1412 = vpop.trf.xlu0
      %v1413 = vpop.trf.xlu0
      %v1414 = vpop.trf.xlu0
      %v1415 = vpop.trf.xlu0
      %v1416 = vpop.trf.xlu0
      %v1417 = vpop.trf.xlu0
      %v1418 = vpop.trf.xlu0
      %v1419 = vpop.trf.xlu0
      %v1420 = vpop.trf.xlu0
      %v1421 = vpop.trf.xlu0
      %v1422 = vpop.trf.xlu0
      %v1423 = vpop.trf.xlu0
      %v1424 = vpop.trf.xlu0
      %v1425 = vpop.trf.xlu0
      %v1426 = vpop.trf.xlu0
      %v1427 = vpop.trf.xlu0
      %vm1428 = vcmask 785408
      %v1430 = vsel %vm1428, %v1412, 0
      %v1433 = vsel %vm1428, %v1413, 0
      %v1436 = vsel %vm1428, %v1414, 0
      %v1439 = vsel %vm1428, %v1415, 0
      %v1442 = vsel %vm1428, %v1416, 0
      %v1445 = vsel %vm1428, %v1417, 0
      %v1448 = vsel %vm1428, %v1418, 0
      %v1451 = vsel %vm1428, %v1419, 0
      %1453 = vmatprep.subr.mxu0 0.0
      %1454 = vmatpush1.msra.mxu0 0.0
      %1455 = vmatprep.subr.mxu0 0.0
      %1456 = vmatpush1.msra.mxu0 0.0
      %1457 = vmatprep.subr.mxu0 0.0
      %1458 = vmatpush1.msra.mxu0 0.0
      %1459 = vmatprep.subr.mxu0 0.0
      %1460 = vmatpush1.msra.mxu0 0.0
      %1461 = vmatprep.subr.mxu0 0.0
      %1462 = vmatpush1.msra.mxu0 %v1395
      %1463 = vmatprep.subr.mxu0 0.0
      %1464 = vmatpush1.msra.mxu0 %v1393
      %1465 = vmatprep.subr.mxu0 0.0
      %1466 = vmatpush1.msra.mxu0 %v1391
      %1467 = vmatprep.subr.mxu0 0.0
      %1468 = vmatpush1.msra.mxu0 %v1389
      %1469 = vmatprep.subr.mxu0 0.0
      %1470 = vmatpush1.msra.mxu0 %v1387
      %1471 = vmatprep.subr.mxu0 0.0
      %1472 = vmatpush1.msra.mxu0 %v1385
      %1473 = vmatprep.subr.mxu0 0.0
      %1474 = vmatpush1.msra.mxu0 %v1383
      %1475 = vmatprep.subr.mxu0 0.0
      %1476 = vmatpush1.msra.mxu0 %v1381
      %1477 = vmatprep.subr.mxu0 0.0
      %1478 = vmatpush1.msra.mxu0 %v1379
      %1479 = vmatprep.subr.mxu0 0.0
      %1480 = vmatpush1.msra.mxu0 %v1377
      %1481 = vmatprep.subr.mxu0 0.0
      %1482 = vmatpush1.msra.mxu0 %v1375
      %1483 = vmatprep.subr.mxu0 0.0
      %1484 = vmatpush1.msra.mxu0 %v1373
      %1485 = vmatprep.subr.mxu0 0.0
      %1486 = vmatpush2.msra.mxu0 0.0
      %1487 = vmatprep.subr.mxu0 0.0
      %1488 = vmatpush2.msra.mxu0 0.0
      %1489 = vmatprep.subr.mxu0 0.0
      %1490 = vmatpush2.msra.mxu0 0.0
      %1491 = vmatprep.subr.mxu0 0.0
      %1492 = vmatpush2.msra.mxu0 0.0
      %1493 = vmatprep.subr.mxu0 0.0
      %1494 = vmatpush2.msra.mxu0 0.0
      %1495 = vmatprep.subr.mxu0 0.0
      %1496 = vmatpush2.msra.mxu0 0.0
      %1497 = vmatprep.subr.mxu0 0.0
      %1498 = vmatpush2.msra.mxu0 0.0
      %1499 = vmatprep.subr.mxu0 0.0
      %1500 = vmatpush2.msra.mxu0 0.0
      %1501 = vmatprep.subr.mxu0 0.0
      %1502 = vmatpush2.msra.mxu0 0.0
      %1503 = vmatprep.subr.mxu0 0.0
      %1504 = vmatpush2.msra.mxu0 0.0
      %1505 = vmatprep.subr.mxu0 0.0
      %1506 = vmatpush2.msra.mxu0 0.0
      %1507 = vmatprep.subr.mxu0 0.0
      %1508 = vmatpush2.msra.mxu0 0.0
      %1509 = vmatprep.subr.mxu0 0.0
      %1510 = vmatpush2.msra.mxu0 0.0
      %1511 = vmatprep.subr.mxu0 0.0
      %1512 = vmatpush2.msra.mxu0 0.0
      %1513 = vmatprep.subr.mxu0 0.0
      %1514 = vmatpush2.msra.mxu0 0.0
      %1515 = vmatprep.subr.mxu0 0.0
      %1516 = vmatpush2.msra.mxu0 0.0
      %1517 = vmatprep.mubr.f32.mxu0 0.0
      %1518 = vmatmul.mubr.f32.gmra.mxu0 %v1430
      %v1519 = vpop.f32.mrf.mxu0
      %v1520 = vadd.f32 0.0, %v1519
      %v1521 = vpop.f32.mrf.mxu0
      %1522 = vmatprep.mubr.f32.mxu0 0.0
      %1523 = vmatmul.mubr.f32.gmra.mxu0 %v1433
      %v1524 = vpop.f32.mrf.mxu0
      %v1525 = vadd.f32 0.0, %v1524
      %v1526 = vpop.f32.mrf.mxu0
      %1527 = vmatprep.mubr.f32.mxu0 0.0
      %1528 = vmatmul.mubr.f32.gmra.mxu0 %v1436
      %v1529 = vpop.f32.mrf.mxu0
      %v1530 = vadd.f32 0.0, %v1529
      %v1531 = vpop.f32.mrf.mxu0
      %1532 = vmatprep.mubr.f32.mxu0 0.0
      %1533 = vmatmul.mubr.f32.gmra.mxu0 %v1439
      %v1534 = vpop.f32.mrf.mxu0
      %v1535 = vadd.f32 0.0, %v1534
      %v1536 = vpop.f32.mrf.mxu0
      %1537 = vmatprep.mubr.f32.mxu0 0.0
      %1538 = vmatmul.mubr.f32.gmra.mxu0 %v1442
      %v1539 = vpop.f32.mrf.mxu0
      %v1540 = vadd.f32 0.0, %v1539
      %v1541 = vpop.f32.mrf.mxu0
      %1542 = vmatprep.mubr.f32.mxu0 0.0
      %1543 = vmatmul.mubr.f32.gmra.mxu0 %v1445
      %v1544 = vpop.f32.mrf.mxu0
      %v1545 = vadd.f32 0.0, %v1544
      %v1546 = vpop.f32.mrf.mxu0
      %1547 = vmatprep.mubr.f32.mxu0 0.0
      %1548 = vmatmul.mubr.f32.gmra.mxu0 %v1448
      %v1549 = vpop.f32.mrf.mxu0
      %v1550 = vadd.f32 0.0, %v1549
      %v1551 = vpop.f32.mrf.mxu0
      %1552 = vmatprep.mubr.f32.mxu0 0.0
      %1553 = vmatmul.mubr.f32.gmra.mxu0 %v1451
      %v1554 = vpop.f32.mrf.mxu0
      %v1555 = vadd.f32 0.0, %v1554
      %v1556 = vpop.f32.mrf.mxu0
      %1557 = vdwg.mxu0
      %v1558 = vmax.f32 %v1520, 1e-30
      %v1559 = vmax.f32 %v1525, 1e-30
      %v1560 = vmax.f32 %v1530, 1e-30
      %v1561 = vmax.f32 %v1535, 1e-30
      %v1562 = vmax.f32 %v1540, 1e-30
      %v1563 = vmax.f32 %v1545, 1e-30
      %v1564 = vmax.f32 %v1550, 1e-30
      %v1565 = vmax.f32 %v1555, 1e-30
      %v1566 = vrcp.pop %v1558
      %v1567 = vrcp.pop %v1559
      %v1568 = vrcp.pop %v1560
      %v1569 = vrcp.pop %v1561
      %v1570 = vrcp.pop %v1562
      %v1571 = vrcp.pop %v1563
      %v1572 = vrcp.pop %v1564
      %v1573 = vrcp.pop %v1565
      %v1574 = vmul.f32 %v1558, %v1566
      %v1575 = vmul.f32 %v1559, %v1567
      %v1576 = vmul.f32 %v1560, %v1568
      %v1577 = vmul.f32 %v1561, %v1569
      %v1578 = vmul.f32 %v1562, %v1570
      %v1579 = vmul.f32 %v1563, %v1571
      %v1580 = vmul.f32 %v1564, %v1572
      %v1581 = vmul.f32 %v1565, %v1573
      %v1582 = vsub.f32 2.0, %v1574
      %v1583 = vsub.f32 2.0, %v1575
      %v1584 = vsub.f32 2.0, %v1576
      %v1585 = vsub.f32 2.0, %v1577
      %v1586 = vsub.f32 2.0, %v1578
      %v1587 = vsub.f32 2.0, %v1579
      %v1588 = vsub.f32 2.0, %v1580
      %v1589 = vsub.f32 2.0, %v1581
      %v1590 = vmul.f32 %v1566, %v1582
      %v1591 = vmul.f32 %v1567, %v1583
      %v1592 = vmul.f32 %v1568, %v1584
      %v1593 = vmul.f32 %v1569, %v1585
      %v1594 = vmul.f32 %v1570, %v1586
      %v1595 = vmul.f32 %v1571, %v1587
      %v1596 = vmul.f32 %v1572, %v1588
      %v1597 = vmul.f32 %v1573, %v1589
      %1598 = vmatprep.subr.mxu0 0.0
      %1599 = vmatpush1.msra.mxu0 0.0
      %1600 = vmatprep.subr.mxu0 0.0
      %1601 = vmatpush1.msra.mxu0 0.0
      %1602 = vmatprep.subr.mxu0 0.0
      %1603 = vmatpush1.msra.mxu0 0.0
      %1604 = vmatprep.subr.mxu0 0.0
      %1605 = vmatpush1.msra.mxu0 0.0
      %1606 = vmatprep.subr.mxu0 0.0
      %1607 = vmatpush1.msra.mxu0 0.0
      %1608 = vmatprep.subr.mxu0 0.0
      %1609 = vmatpush1.msra.mxu0 0.0
      %1610 = vmatprep.subr.mxu0 0.0
      %1611 = vmatpush1.msra.mxu0 0.0
      %1612 = vmatprep.subr.mxu0 0.0
      %1613 = vmatpush1.msra.mxu0 0.0
      %1614 = vmatprep.subr.mxu0 0.0
      %1615 = vmatpush1.msra.mxu0 %v1597
      %1616 = vmatprep.subr.mxu0 0.0
      %1617 = vmatpush1.msra.mxu0 %v1596
      %1618 = vmatprep.subr.mxu0 0.0
      %1619 = vmatpush1.msra.mxu0 %v1595
      %1620 = vmatprep.subr.mxu0 0.0
      %1621 = vmatpush1.msra.mxu0 %v1594
      %1622 = vmatprep.subr.mxu0 0.0
      %1623 = vmatpush1.msra.mxu0 %v1593
      %1624 = vmatprep.subr.mxu0 0.0
      %1625 = vmatpush1.msra.mxu0 %v1592
      %1626 = vmatprep.subr.mxu0 0.0
      %1627 = vmatpush1.msra.mxu0 %v1591
      %1628 = vmatprep.subr.mxu0 0.0
      %1629 = vmatpush1.msra.mxu0 %v1590
      %1630 = vmatprep.subr.mxu0 0.0
      %1631 = vmatpush2.msra.mxu0 0.0
      %1632 = vmatprep.subr.mxu0 0.0
      %1633 = vmatpush2.msra.mxu0 0.0
      %1634 = vmatprep.subr.mxu0 0.0
      %1635 = vmatpush2.msra.mxu0 0.0
      %1636 = vmatprep.subr.mxu0 0.0
      %1637 = vmatpush2.msra.mxu0 0.0
      %1638 = vmatprep.subr.mxu0 0.0
      %1639 = vmatpush2.msra.mxu0 0.0
      %1640 = vmatprep.subr.mxu0 0.0
      %1641 = vmatpush2.msra.mxu0 0.0
      %1642 = vmatprep.subr.mxu0 0.0
      %1643 = vmatpush2.msra.mxu0 0.0
      %1644 = vmatprep.subr.mxu0 0.0
      %1645 = vmatpush2.msra.mxu0 0.0
      %1646 = vmatprep.subr.mxu0 0.0
      %1647 = vmatpush2.msra.mxu0 0.0
      %1648 = vmatprep.subr.mxu0 0.0
      %1649 = vmatpush2.msra.mxu0 0.0
      %1650 = vmatprep.subr.mxu0 0.0
      %1651 = vmatpush2.msra.mxu0 0.0
      %1652 = vmatprep.subr.mxu0 0.0
      %1653 = vmatpush2.msra.mxu0 0.0
      %1654 = vmatprep.subr.mxu0 0.0
      %1655 = vmatpush2.msra.mxu0 0.0
      %1656 = vmatprep.subr.mxu0 0.0
      %1657 = vmatpush2.msra.mxu0 0.0
      %1658 = vmatprep.subr.mxu0 0.0
      %1659 = vmatpush2.msra.mxu0 0.0
      %1660 = vmatprep.subr.mxu0 0.0
      %1661 = vmatpush2.msra.mxu0 0.0
      %1662 = vmatprep.mubr.f32.mxu0 0.0
      %1663 = vmatmul.mubr.f32.gmra.mxu0 %v518
      %v1664 = vpop.f32.mrf.mxu0
      %v1665 = vadd.f32 0.0, %v1664
      %v1666 = vpop.f32.mrf.mxu0
      %1667 = vmatprep.mubr.f32.mxu0 0.0
      %1668 = vmatmul.mubr.f32.gmra.mxu0 %v521
      %v1669 = vpop.f32.mrf.mxu0
      %v1670 = vadd.f32 0.0, %v1669
      %v1671 = vpop.f32.mrf.mxu0
      %1672 = vmatprep.mubr.f32.mxu0 0.0
      %1673 = vmatmul.mubr.f32.gmra.mxu0 %v524
      %v1674 = vpop.f32.mrf.mxu0
      %v1675 = vadd.f32 0.0, %v1674
      %v1676 = vpop.f32.mrf.mxu0
      %1677 = vmatprep.mubr.f32.mxu0 0.0
      %1678 = vmatmul.mubr.f32.gmra.mxu0 %v527
      %v1679 = vpop.f32.mrf.mxu0
      %v1680 = vadd.f32 0.0, %v1679
      %v1681 = vpop.f32.mrf.mxu0
      %1682 = vmatprep.mubr.f32.mxu0 0.0
      %1683 = vmatmul.mubr.f32.gmra.mxu0 %v530
      %v1684 = vpop.f32.mrf.mxu0
      %v1685 = vadd.f32 0.0, %v1684
      %v1686 = vpop.f32.mrf.mxu0
      %1687 = vmatprep.mubr.f32.mxu0 0.0
      %1688 = vmatmul.mubr.f32.gmra.mxu0 %v533
      %v1689 = vpop.f32.mrf.mxu0
      %v1690 = vadd.f32 0.0, %v1689
      %v1691 = vpop.f32.mrf.mxu0
      %1692 = vmatprep.mubr.f32.mxu0 0.0
      %1693 = vmatmul.mubr.f32.gmra.mxu0 %v536
      %v1694 = vpop.f32.mrf.mxu0
      %v1695 = vadd.f32 0.0, %v1694
      %v1696 = vpop.f32.mrf.mxu0
      %1697 = vmatprep.mubr.f32.mxu0 0.0
      %1698 = vmatmul.mubr.f32.gmra.mxu0 %v539
      %v1699 = vpop.f32.mrf.mxu0
      %v1700 = vadd.f32 0.0, %v1699
      %v1701 = vpop.f32.mrf.mxu0
      %1702 = vmatprep.mubr.f32.mxu0 0.0
      %1703 = vmatmul.mubr.f32.gmra.mxu0 %v542
      %v1704 = vpop.f32.mrf.mxu0
      %v1705 = vadd.f32 0.0, %v1704
      %v1706 = vpop.f32.mrf.mxu0
      %1707 = vmatprep.mubr.f32.mxu0 0.0
      %1708 = vmatmul.mubr.f32.gmra.mxu0 %v545
      %v1709 = vpop.f32.mrf.mxu0
      %v1710 = vadd.f32 0.0, %v1709
      %v1711 = vpop.f32.mrf.mxu0
      %1712 = vmatprep.mubr.f32.mxu0 0.0
      %1713 = vmatmul.mubr.f32.gmra.mxu0 %v548
      %v1714 = vpop.f32.mrf.mxu0
      %v1715 = vadd.f32 0.0, %v1714
      %v1716 = vpop.f32.mrf.mxu0
      %1717 = vmatprep.mubr.f32.mxu0 0.0
      %1718 = vmatmul.mubr.f32.gmra.mxu0 %v551
      %v1719 = vpop.f32.mrf.mxu0
      %v1720 = vadd.f32 0.0, %v1719
      %v1721 = vpop.f32.mrf.mxu0
      %1722 = vdwg.mxu0
      %v1723 = vmul.f32 %v1373, %v1665
      %v1724 = vmul.f32 %v1375, %v1670
      %v1725 = vmul.f32 %v1377, %v1675
      %v1726 = vmul.f32 %v1379, %v1680
      %v1727 = vmul.f32 %v1381, %v1685
      %v1728 = vmul.f32 %v1383, %v1690
      %v1729 = vmul.f32 %v1385, %v1695
      %v1730 = vmul.f32 %v1387, %v1700
      %v1731 = vmul.f32 %v1389, %v1705
      %v1732 = vmul.f32 %v1391, %v1710
      %v1733 = vmul.f32 %v1393, %v1715
      %v1734 = vmul.f32 %v1395, %v1720
      %v1735 = vld [vmem:[%s2 + $0x1e0] sm:$0xf]
      %v1737 = vsel %vm1330, %v1723, 0
      %v1740 = vsel %vm1330, %v1724, 0
      %v1743 = vsel %vm1330, %v1725, 0
      %v1746 = vsel %vm1330, %v1726, 0
      %v1749 = vsel %vm1330, %v1727, 0
      %v1752 = vsel %vm1330, %v1728, 0
      %v1755 = vsel %vm1330, %v1729, 0
      %v1758 = vsel %vm1330, %v1730, 0
      %v1761 = vsel %vm1330, %v1731, 0
      %v1764 = vsel %vm1330, %v1732, 0
      %v1767 = vsel %vm1330, %v1733, 0
      %v1770 = vsel %vm1330, %v1734, 0
      %vm1772 = vcmask 1043456
      %v1774 = vsel %vm1772, %v1735, 0
      %1776 = vmatprep.subr.mxu0 0.0
      %1777 = vmatpush1.msra.mxu0 0.0
      %1778 = vmatprep.subr.mxu0 0.0
      %1779 = vmatpush1.msra.mxu0 0.0
      %1780 = vmatprep.subr.mxu0 0.0
      %1781 = vmatpush1.msra.mxu0 0.0
      %1782 = vmatprep.subr.mxu0 0.0
      %1783 = vmatpush1.msra.mxu0 0.0
      %1784 = vmatprep.subr.mxu0 0.0
      %1785 = vmatpush1.msra.mxu0 0.0
      %1786 = vmatprep.subr.mxu0 0.0
      %1787 = vmatpush1.msra.mxu0 0.0
      %1788 = vmatprep.subr.mxu0 0.0
      %1789 = vmatpush1.msra.mxu0 0.0
      %1790 = vmatprep.subr.mxu0 0.0
      %1791 = vmatpush1.msra.mxu0 0.0
      %1792 = vmatprep.subr.mxu0 0.0
      %1793 = vmatpush1.msra.mxu0 0.0
      %1794 = vmatprep.subr.mxu0 0.0
      %1795 = vmatpush1.msra.mxu0 0.0
      %1796 = vmatprep.subr.mxu0 0.0
      %1797 = vmatpush1.msra.mxu0 0.0
      %1798 = vmatprep.subr.mxu0 0.0
      %1799 = vmatpush1.msra.mxu0 0.0
      %1800 = vmatprep.subr.mxu0 0.0
      %1801 = vmatpush1.msra.mxu0 0.0
      %1802 = vmatprep.subr.mxu0 0.0
      %1803 = vmatpush1.msra.mxu0 0.0
      %1804 = vmatprep.subr.mxu0 0.0
      %1805 = vmatpush1.msra.mxu0 0.0
      %1806 = vmatprep.subr.mxu0 0.0
      %1807 = vmatpush1.msra.mxu0 %v1774
      %1808 = vmatprep.subr.mxu0 0.0
      %1809 = vmatpush2.msra.mxu0 0.0
      %1810 = vmatprep.subr.mxu0 0.0
      %1811 = vmatpush2.msra.mxu0 0.0
      %1812 = vmatprep.subr.mxu0 0.0
      %1813 = vmatpush2.msra.mxu0 0.0
      %1814 = vmatprep.subr.mxu0 0.0
      %1815 = vmatpush2.msra.mxu0 0.0
      %1816 = vmatprep.subr.mxu0 0.0
      %1817 = vmatpush2.msra.mxu0 0.0
      %1818 = vmatprep.subr.mxu0 0.0
      %1819 = vmatpush2.msra.mxu0 0.0
      %1820 = vmatprep.subr.mxu0 0.0
      %1821 = vmatpush2.msra.mxu0 0.0
      %1822 = vmatprep.subr.mxu0 0.0
      %1823 = vmatpush2.msra.mxu0 0.0
      %1824 = vmatprep.subr.mxu0 0.0
      %1825 = vmatpush2.msra.mxu0 0.0
      %1826 = vmatprep.subr.mxu0 0.0
      %1827 = vmatpush2.msra.mxu0 0.0
      %1828 = vmatprep.subr.mxu0 0.0
      %1829 = vmatpush2.msra.mxu0 0.0
      %1830 = vmatprep.subr.mxu0 0.0
      %1831 = vmatpush2.msra.mxu0 0.0
      %1832 = vmatprep.subr.mxu0 0.0
      %1833 = vmatpush2.msra.mxu0 0.0
      %1834 = vmatprep.subr.mxu0 0.0
      %1835 = vmatpush2.msra.mxu0 0.0
      %1836 = vmatprep.subr.mxu0 0.0
      %1837 = vmatpush2.msra.mxu0 0.0
      %1838 = vmatprep.subr.mxu0 0.0
      %1839 = vmatpush2.msra.mxu0 0.0
      %1840 = vmatprep.mubr.f32.mxu0 0.0
      %1841 = vmatmul.mubr.f32.gmra.mxu0 %v1737
      %v1842 = vpop.f32.mrf.mxu0
      %v1843 = vadd.f32 0.0, %v1842
      %v1844 = vpop.f32.mrf.mxu0
      %1845 = vmatprep.mubr.f32.mxu0 0.0
      %1846 = vmatmul.mubr.f32.gmra.mxu0 %v1740
      %v1847 = vpop.f32.mrf.mxu0
      %v1848 = vadd.f32 0.0, %v1847
      %v1849 = vpop.f32.mrf.mxu0
      %1850 = vmatprep.mubr.f32.mxu0 0.0
      %1851 = vmatmul.mubr.f32.gmra.mxu0 %v1743
      %v1852 = vpop.f32.mrf.mxu0
      %v1853 = vadd.f32 0.0, %v1852
      %v1854 = vpop.f32.mrf.mxu0
      %1855 = vmatprep.mubr.f32.mxu0 0.0
      %1856 = vmatmul.mubr.f32.gmra.mxu0 %v1746
      %v1857 = vpop.f32.mrf.mxu0
      %v1858 = vadd.f32 0.0, %v1857
      %v1859 = vpop.f32.mrf.mxu0
      %1860 = vmatprep.mubr.f32.mxu0 0.0
      %1861 = vmatmul.mubr.f32.gmra.mxu0 %v1749
      %v1862 = vpop.f32.mrf.mxu0
      %v1863 = vadd.f32 0.0, %v1862
      %v1864 = vpop.f32.mrf.mxu0
      %1865 = vmatprep.mubr.f32.mxu0 0.0
      %1866 = vmatmul.mubr.f32.gmra.mxu0 %v1752
      %v1867 = vpop.f32.mrf.mxu0
      %v1868 = vadd.f32 0.0, %v1867
      %v1869 = vpop.f32.mrf.mxu0
      %1870 = vmatprep.mubr.f32.mxu0 0.0
      %1871 = vmatmul.mubr.f32.gmra.mxu0 %v1755
      %v1872 = vpop.f32.mrf.mxu0
      %v1873 = vadd.f32 0.0, %v1872
      %v1874 = vpop.f32.mrf.mxu0
      %1875 = vmatprep.mubr.f32.mxu0 0.0
      %1876 = vmatmul.mubr.f32.gmra.mxu0 %v1758
      %v1877 = vpop.f32.mrf.mxu0
      %v1878 = vadd.f32 0.0, %v1877
      %v1879 = vpop.f32.mrf.mxu0
      %1880 = vmatprep.mubr.f32.mxu0 0.0
      %1881 = vmatmul.mubr.f32.gmra.mxu0 %v1761
      %v1882 = vpop.f32.mrf.mxu0
      %v1883 = vadd.f32 0.0, %v1882
      %v1884 = vpop.f32.mrf.mxu0
      %1885 = vmatprep.mubr.f32.mxu0 0.0
      %1886 = vmatmul.mubr.f32.gmra.mxu0 %v1764
      %v1887 = vpop.f32.mrf.mxu0
      %v1888 = vadd.f32 0.0, %v1887
      %v1889 = vpop.f32.mrf.mxu0
      %1890 = vmatprep.mubr.f32.mxu0 0.0
      %1891 = vmatmul.mubr.f32.gmra.mxu0 %v1767
      %v1892 = vpop.f32.mrf.mxu0
      %v1893 = vadd.f32 0.0, %v1892
      %v1894 = vpop.f32.mrf.mxu0
      %1895 = vmatprep.mubr.f32.mxu0 0.0
      %1896 = vmatmul.mubr.f32.gmra.mxu0 %v1770
      %v1897 = vpop.f32.mrf.mxu0
      %v1898 = vadd.f32 0.0, %v1897
      %v1899 = vpop.f32.mrf.mxu0
      %1900 = vdwg.mxu0
      %v1901 = vmul.f32 %v1095, %v1843
      %v1902 = vmul.f32 %v1100, %v1848
      %v1903 = vmul.f32 %v1105, %v1853
      %v1904 = vmul.f32 %v1110, %v1858
      %v1905 = vmul.f32 %v1115, %v1863
      %v1906 = vmul.f32 %v1120, %v1868
      %v1907 = vmul.f32 %v1125, %v1873
      %v1908 = vmul.f32 %v1130, %v1878
      %v1909 = vmul.f32 %v1135, %v1883
      %v1910 = vmul.f32 %v1140, %v1888
      %v1911 = vmul.f32 %v1145, %v1893
      %v1912 = vmul.f32 %v1150, %v1898
      %1913 = vmatprep.subr.mxu0 0.0
      %1914 = vmatpush1.msra.mxu0 0.0
      %1915 = vmatprep.subr.mxu0 0.0
      %1916 = vmatpush1.msra.mxu0 0.0
      %1917 = vmatprep.subr.mxu0 0.0
      %1918 = vmatpush1.msra.mxu0 0.0
      %1919 = vmatprep.subr.mxu0 0.0
      %1920 = vmatpush1.msra.mxu0 0.0
      %1921 = vmatprep.subr.mxu0 0.0
      %1922 = vmatpush1.msra.mxu0 %v1912
      %1923 = vmatprep.subr.mxu0 0.0
      %1924 = vmatpush1.msra.mxu0 %v1911
      %1925 = vmatprep.subr.mxu0 0.0
      %1926 = vmatpush1.msra.mxu0 %v1910
      %1927 = vmatprep.subr.mxu0 0.0
      %1928 = vmatpush1.msra.mxu0 %v1909
      %1929 = vmatprep.subr.mxu0 0.0
      %1930 = vmatpush1.msra.mxu0 %v1908
      %1931 = vmatprep.subr.mxu0 0.0
      %1932 = vmatpush1.msra.mxu0 %v1907
      %1933 = vmatprep.subr.mxu0 0.0
      %1934 = vmatpush1.msra.mxu0 %v1906
      %1935 = vmatprep.subr.mxu0 0.0
      %1936 = vmatpush1.msra.mxu0 %v1905
      %1937 = vmatprep.subr.mxu0 0.0
      %1938 = vmatpush1.msra.mxu0 %v1904
      %1939 = vmatprep.subr.mxu0 0.0
      %1940 = vmatpush1.msra.mxu0 %v1903
      %1941 = vmatprep.subr.mxu0 0.0
      %1942 = vmatpush1.msra.mxu0 %v1902
      %1943 = vmatprep.subr.mxu0 0.0
      %1944 = vmatpush1.msra.mxu0 %v1901
      %1945 = vmatprep.subr.mxu0 0.0
      %1946 = vmatpush2.msra.mxu0 0.0
      %1947 = vmatprep.subr.mxu0 0.0
      %1948 = vmatpush2.msra.mxu0 0.0
      %1949 = vmatprep.subr.mxu0 0.0
      %1950 = vmatpush2.msra.mxu0 0.0
      %1951 = vmatprep.subr.mxu0 0.0
      %1952 = vmatpush2.msra.mxu0 0.0
      %1953 = vmatprep.subr.mxu0 0.0
      %1954 = vmatpush2.msra.mxu0 0.0
      %1955 = vmatprep.subr.mxu0 0.0
      %1956 = vmatpush2.msra.mxu0 0.0
      %1957 = vmatprep.subr.mxu0 0.0
      %1958 = vmatpush2.msra.mxu0 0.0
      %1959 = vmatprep.subr.mxu0 0.0
      %1960 = vmatpush2.msra.mxu0 0.0
      %1961 = vmatprep.subr.mxu0 0.0
      %1962 = vmatpush2.msra.mxu0 0.0
      %1963 = vmatprep.subr.mxu0 0.0
      %1964 = vmatpush2.msra.mxu0 0.0
      %1965 = vmatprep.subr.mxu0 0.0
      %1966 = vmatpush2.msra.mxu0 0.0
      %1967 = vmatprep.subr.mxu0 0.0
      %1968 = vmatpush2.msra.mxu0 0.0
      %1969 = vmatprep.subr.mxu0 0.0
      %1970 = vmatpush2.msra.mxu0 0.0
      %1971 = vmatprep.subr.mxu0 0.0
      %1972 = vmatpush2.msra.mxu0 0.0
      %1973 = vmatprep.subr.mxu0 0.0
      %1974 = vmatpush2.msra.mxu0 0.0
      %1975 = vmatprep.subr.mxu0 0.0
      %1976 = vmatpush2.msra.mxu0 0.0
      %1977 = vmatprep.mubr.f32.mxu0 0.0
      %1978 = vmatmul.mubr.f32.gmra.mxu0 %v1430
      %v1979 = vpop.f32.mrf.mxu0
      %v1980 = vadd.f32 0.0, %v1979
      %v1981 = vpop.f32.mrf.mxu0
      %1982 = vmatprep.mubr.f32.mxu0 0.0
      %1983 = vmatmul.mubr.f32.gmra.mxu0 %v1433
      %v1984 = vpop.f32.mrf.mxu0
      %v1985 = vadd.f32 0.0, %v1984
      %v1986 = vpop.f32.mrf.mxu0
      %1987 = vmatprep.mubr.f32.mxu0 0.0
      %1988 = vmatmul.mubr.f32.gmra.mxu0 %v1436
      %v1989 = vpop.f32.mrf.mxu0
      %v1990 = vadd.f32 0.0, %v1989
      %v1991 = vpop.f32.mrf.mxu0
      %1992 = vmatprep.mubr.f32.mxu0 0.0
      %1993 = vmatmul.mubr.f32.gmra.mxu0 %v1439
      %v1994 = vpop.f32.mrf.mxu0
      %v1995 = vadd.f32 0.0, %v1994
      %v1996 = vpop.f32.mrf.mxu0
      %1997 = vmatprep.mubr.f32.mxu0 0.0
      %1998 = vmatmul.mubr.f32.gmra.mxu0 %v1442
      %v1999 = vpop.f32.mrf.mxu0
      %v2000 = vadd.f32 0.0, %v1999
      %v2001 = vpop.f32.mrf.mxu0
      %2002 = vmatprep.mubr.f32.mxu0 0.0
      %2003 = vmatmul.mubr.f32.gmra.mxu0 %v1445
      %v2004 = vpop.f32.mrf.mxu0
      %v2005 = vadd.f32 0.0, %v2004
      %v2006 = vpop.f32.mrf.mxu0
      %2007 = vmatprep.mubr.f32.mxu0 0.0
      %2008 = vmatmul.mubr.f32.gmra.mxu0 %v1448
      %v2009 = vpop.f32.mrf.mxu0
      %v2010 = vadd.f32 0.0, %v2009
      %v2011 = vpop.f32.mrf.mxu0
      %2012 = vmatprep.mubr.f32.mxu0 0.0
      %2013 = vmatmul.mubr.f32.gmra.mxu0 %v1451
      %v2014 = vpop.f32.mrf.mxu0
      %v2015 = vadd.f32 0.0, %v2014
      %v2016 = vpop.f32.mrf.mxu0
      %2017 = vdwg.mxu0
      %v2018 = vld [vmem:[%s2 + $0x50] sm:$0xff]
      %v2019 = vld [vmem:[%s2 + $0x60] sm:$0xff]
      %v2020 = vld [vmem:[%s2 + $0x70] sm:$0xff]
      %v2021 = vld [vmem:[%s2 + $0x80] sm:$0xff]
      %v2022 = vld [vmem:[%s2 + $0x90] ss:$0 sm:$0xff]
      %v2024 = vsel %vm378, %v1980, 0
      %v2027 = vsel %vm378, %v1985, 0
      %v2030 = vsel %vm378, %v1990, 0
      %v2033 = vsel %vm378, %v1995, 0
      %v2036 = vsel %vm378, %v2000, 0
      %v2039 = vsel %vm378, %v2005, 0
      %v2042 = vsel %vm378, %v2010, 0
      %v2045 = vsel %vm378, %v2015, 0
      %2047 = vmatprep.subr.mxu0 0.0
      %2048 = vmatpush1.msra.mxu0 0.0
      %2049 = vmatprep.subr.mxu0 0.0
      %2050 = vmatpush1.msra.mxu0 0.0
      %2051 = vmatprep.subr.mxu0 0.0
      %2052 = vmatpush1.msra.mxu0 0.0
      %2053 = vmatprep.subr.mxu0 0.0
      %2054 = vmatpush1.msra.mxu0 0.0
      %2055 = vmatprep.subr.mxu0 0.0
      %2056 = vmatpush1.msra.mxu0 0.0
      %2057 = vmatprep.subr.mxu0 0.0
      %2058 = vmatpush1.msra.mxu0 0.0
      %2059 = vmatprep.subr.mxu0 0.0
      %2060 = vmatpush1.msra.mxu0 0.0
      %2061 = vmatprep.subr.mxu0 0.0
      %2062 = vmatpush1.msra.mxu0 0.0
      %2063 = vmatprep.subr.mxu0 0.0
      %2064 = vmatpush1.msra.mxu0 0.0
      %2065 = vmatprep.subr.mxu0 0.0
      %2066 = vmatpush1.msra.mxu0 0.0
      %2067 = vmatprep.subr.mxu0 0.0
      %2068 = vmatpush1.msra.mxu0 0.0
      %2069 = vmatprep.subr.mxu0 0.0
      %2070 = vmatpush1.msra.mxu0 0.0
      %2071 = vmatprep.subr.mxu0 0.0
      %2072 = vmatpush1.msra.mxu0 %v2021
      %2073 = vmatprep.subr.mxu0 0.0
      %2074 = vmatpush1.msra.mxu0 %v2020
      %2075 = vmatprep.subr.mxu0 0.0
      %2076 = vmatpush1.msra.mxu0 %v2019
      %2077 = vmatprep.subr.mxu0 0.0
      %2078 = vmatpush1.msra.mxu0 %v2018
      %2079 = vmatprep.subr.mxu0 0.0
      %2080 = vmatpush2.msra.mxu0 0.0
      %2081 = vmatprep.subr.mxu0 0.0
      %2082 = vmatpush2.msra.mxu0 0.0
      %2083 = vmatprep.subr.mxu0 0.0
      %2084 = vmatpush2.msra.mxu0 0.0
      %2085 = vmatprep.subr.mxu0 0.0
      %2086 = vmatpush2.msra.mxu0 0.0
      %2087 = vmatprep.subr.mxu0 0.0
      %2088 = vmatpush2.msra.mxu0 0.0
      %2089 = vmatprep.subr.mxu0 0.0
      %2090 = vmatpush2.msra.mxu0 0.0
      %2091 = vmatprep.subr.mxu0 0.0
      %2092 = vmatpush2.msra.mxu0 0.0
      %2093 = vmatprep.subr.mxu0 0.0
      %2094 = vmatpush2.msra.mxu0 0.0
      %2095 = vmatprep.subr.mxu0 0.0
      %2096 = vmatpush2.msra.mxu0 0.0
      %2097 = vmatprep.subr.mxu0 0.0
      %2098 = vmatpush2.msra.mxu0 0.0
      %2099 = vmatprep.subr.mxu0 0.0
      %2100 = vmatpush2.msra.mxu0 0.0
      %2101 = vmatprep.subr.mxu0 0.0
      %2102 = vmatpush2.msra.mxu0 0.0
      %2103 = vmatprep.subr.mxu0 0.0
      %2104 = vmatpush2.msra.mxu0 0.0
      %2105 = vmatprep.subr.mxu0 0.0
      %2106 = vmatpush2.msra.mxu0 0.0
      %2107 = vmatprep.subr.mxu0 0.0
      %2108 = vmatpush2.msra.mxu0 0.0
      %2109 = vmatprep.subr.mxu0 0.0
      %2110 = vmatpush2.msra.mxu0 0.0
      %2111 = vmatprep.mubr.f32.mxu0 0.0
      %2112 = vmatmul.mubr.f32.gmra.mxu0 %v2024
      %v2113 = vpop.f32.mrf.mxu0
      %v2114 = vadd.f32 %v2022, %v2113
      %v2115 = vpop.f32.mrf.mxu0
      %2116 = vmatprep.mubr.f32.mxu0 0.0
      %2117 = vmatmul.mubr.f32.gmra.mxu0 %v2027
      %v2118 = vpop.f32.mrf.mxu0
      %v2119 = vadd.f32 %v2022, %v2118
      %v2120 = vpop.f32.mrf.mxu0
      %2121 = vmatprep.mubr.f32.mxu0 0.0
      %2122 = vmatmul.mubr.f32.gmra.mxu0 %v2030
      %v2123 = vpop.f32.mrf.mxu0
      %v2124 = vadd.f32 %v2022, %v2123
      %v2125 = vpop.f32.mrf.mxu0
      %2126 = vmatprep.mubr.f32.mxu0 0.0
      %2127 = vmatmul.mubr.f32.gmra.mxu0 %v2033
      %v2128 = vpop.f32.mrf.mxu0
      %v2129 = vadd.f32 %v2022, %v2128
      %v2130 = vpop.f32.mrf.mxu0
      %2131 = vmatprep.mubr.f32.mxu0 0.0
      %2132 = vmatmul.mubr.f32.gmra.mxu0 %v2036
      %v2133 = vpop.f32.mrf.mxu0
      %v2134 = vadd.f32 %v2022, %v2133
      %v2135 = vpop.f32.mrf.mxu0
      %2136 = vmatprep.mubr.f32.mxu0 0.0
      %2137 = vmatmul.mubr.f32.gmra.mxu0 %v2039
      %v2138 = vpop.f32.mrf.mxu0
      %v2139 = vadd.f32 %v2022, %v2138
      %v2140 = vpop.f32.mrf.mxu0
      %2141 = vmatprep.mubr.f32.mxu0 0.0
      %2142 = vmatmul.mubr.f32.gmra.mxu0 %v2042
      %v2143 = vpop.f32.mrf.mxu0
      %v2144 = vadd.f32 %v2022, %v2143
      %v2145 = vpop.f32.mrf.mxu0
      %2146 = vmatprep.mubr.f32.mxu0 0.0
      %2147 = vmatmul.mubr.f32.gmra.mxu0 %v2045
      %v2148 = vpop.f32.mrf.mxu0
      %v2149 = vadd.f32 %v2022, %v2148
      %v2150 = vpop.f32.mrf.mxu0
      %2151 = vdwg.mxu0
      %2152 = vst.msk [vmem:[%s190] sm:$0xff] %vm378, %v2114
      %2153 = vst.msk [vmem:[%s190 + $0x8] sm:$0xff] %vm378, %v2119
      %2154 = vst.msk [vmem:[%s190 + $0x10] sm:$0xff] %vm378, %v2124
      %2155 = vst.msk [vmem:[%s190 + $0x18] sm:$0xff] %vm378, %v2129
      %2156 = vst.msk [vmem:[%s190 + $0x20] sm:$0xff] %vm378, %v2134
      %2157 = vst.msk [vmem:[%s190 + $0x28] sm:$0xff] %vm378, %v2139
      %2158 = vst.msk [vmem:[%s190 + $0x30] sm:$0xff] %vm378, %v2144
      %2159 = vst.msk [vmem:[%s190 + $0x38] sm:$0xff] %vm378, %v2149
      %p2160 = scmp.lt.s32.totalorder %s14, 1
      %s2161 = scalar_select %p2160, %s14, 1
      %s2162 = smul.addr %s2161, 8
      %s2163 = smul.addr %s2162, 8
      %s2164 = scalar_lea.vmem %s3, %s2163
      // Predicated region
      $region33: #{typed_self_attn_forward.1} parent=31 // pred_check
        %p2165 = pneg %p105
      $region34: #{typed_self_attn_forward.1} parent=31 // pred_check_branch
        %2167 = sbr.rel (%p2165) target = $region36
      $region35: #{typed_self_attn_forward.1} parent=31 // pred_region
        _
      $region36: #{typed_self_attn_forward.1} parent=31 // pred_fallthru
        _
    $region32: #{typed_self_attn_forward.1} parent=5 // pred_fallthru
      _
    %p2168 = scmp.le.s32.totalorder 2, %s9
    // Predicated region
    $region37: #{typed_self_attn_forward.1} parent=5 // pred_check
      %p2169 = pneg %p2168
    $region38: #{typed_self_attn_forward.1} parent=5 // pred_check_branch
      %2171 = sbr.rel (%p2169) target = $region40
    $region39: #{typed_self_attn_forward.1} parent=5 // pred_region
      %s2172 = ssub.s32 %s9, 2
      // Predicated region
      $region41: #{typed_self_attn_forward.1} parent=39 // pred_check
        %p2173 = pneg %p111
      $region42: #{typed_self_attn_forward.1} parent=39 // pred_check_branch
        %2175 = sbr.rel (%p2173) target = $region44
      $region43: #{typed_self_attn_forward.1} parent=39 // pred_region
        %p2176 = scmp.lt.s32.totalorder %s15, 1
        %s2177 = scalar_select %p2176, %s15, 1
        %s2178 = smul.addr %s2177, 8
        %s2179 = smul.addr %s2178, 8
        %s2180 = scalar_lea.vmem %s3, %s2179
      $region44: #{typed_self_attn_forward.1} parent=39 // pred_fallthru
        _
    $region40: #{typed_self_attn_forward.1} parent=5 // pred_fallthru
      _
  $region6: #{typed_self_attn_forward.1} parent=0 // loop_footer
    %s13 = sadd.s32 1, %s9
  $region7: #{typed_self_attn_forward.1} parent=0 // loop_footer_branch
    %8 = sbr.rel target = $region3
  $region8: #{typed_self_attn_forward.1} parent=0 // loop_exit
    _

</llo_original>
